<compile_context>
chip_gen: v7x
topology: tpu7x:2x2x1
jax: 0.10.0
libtpu: 0.0.40
codegen_flags: <defaults>
</compile_context>

<pallas_src>
import functools

import jax
import jax.numpy as jnp
from jax import lax
from jax.experimental import pallas as pl
from jax.experimental.pallas import tpu as pltpu

# --- model hyperparameters (from modelv2.py) ---
N_EMBED = 32
N_HEADS = 4
HEAD_SIZE = N_EMBED // N_HEADS  # 8


def _mha_kernel(x_ref, wqkv_ref, wp_ref, bp_ref, o_ref, *, n_heads, head_size):
    # x_ref:    (B, T, C)
    # wqkv_ref: (C, 3*H)           fused [Wq*scale | Wk | Wv]
    # wp_ref:   (n_heads, hs, C)   per-head slices of the projection matrix
    # bp_ref:   (1, C)
    # o_ref:    (B, T, C)
    B, T, C = x_ref.shape
    hs = head_size
    H = n_heads * hs

    x2 = x_ref[...].reshape(B * T, C).astype(jnp.float32)                # (B*T, C)

    # Single fused QKV matmul for the whole batch (scale pre-folded into Q cols).
    qkv = jnp.dot(x2, wqkv_ref[...], preferred_element_type=jnp.float32)  # (B*T, 3H)
    qkv3 = qkv.reshape(B, T, 3 * H)
    q = qkv3[..., 0 * H:1 * H]                                            # (B, T, H)
    k = qkv3[..., 1 * H:2 * H]
    v = qkv3[..., 2 * H:3 * H]

    # Stack heads on the leading (batch) axis -> one rank-3 batched chain for
    # scores / mask / softmax / PV over all heads at once.
    q_all = jnp.concatenate([q[..., h * hs:(h + 1) * hs] for h in range(n_heads)], axis=0)
    k_all = jnp.concatenate([k[..., h * hs:(h + 1) * hs] for h in range(n_heads)], axis=0)
    v_all = jnp.concatenate([v[..., h * hs:(h + 1) * hs] for h in range(n_heads)], axis=0)
    # each: (n_heads*B, T, hs)

    # Causal mask built once (lower triangular, like torch.tril).
    row = lax.broadcasted_iota(jnp.int32, (T, T), 0)
    col = lax.broadcasted_iota(jnp.int32, (T, T), 1)
    causal = (row >= col)[None, :, :]                                     # (1, T, T)
    neg_big = jnp.float32(-1e30)   # large-negative instead of -inf (NaN-safe)

    # One batched score einsum for all heads (no explicit transpose; scale folded).
    s = jnp.einsum('bqd,bkd->bqk', q_all, k_all,
                   preferred_element_type=jnp.float32)                    # (nh*B, T, T)
    s = jnp.where(causal, s, neg_big)

    # Numerically stable softmax with DEFERRED normalization (f32, v5e-safe).
    m = jnp.max(s, axis=-1, keepdims=True)
    e = jnp.exp(s - m)
    denom = jnp.sum(e, axis=-1, keepdims=True)                            # (nh*B, T, 1)

    ctx = jnp.einsum('bqk,bkd->bqd', e, v_all,
                     preferred_element_type=jnp.float32)                  # (nh*B, T, hs)
    ctx = ctx * (1.0 / denom)            # normalize the (T,hs) context, not the (T,T) probs

    # Sum-over-heads projection accumulator (no lane reassembly of heads).
    acc = jnp.zeros((B * T, C), jnp.float32)
    for h in range(n_heads):             # static loop, unrolled at trace time
        ctx_h = ctx[h * B:(h + 1) * B].reshape(B * T, hs)
        acc = acc + jnp.dot(ctx_h, wp_ref[h],
                            preferred_element_type=jnp.float32)           # (B*T, C)

    out = acc + bp_ref[...]                                               # + bias (1, C)
    o_ref[...] = out.reshape(B, T, C).astype(o_ref.dtype)


def prepare_mha_params(wq, wk, wv, wp, bp, *, n_heads=N_HEADS, head_size=HEAD_SIZE):
    """One-time parameter fusion. Call at init, NOT per forward.

    wq/wk/wv: (C, H); wp: (H, C); bp: (1, C).
    Returns (w_qkv, wp3, bp) with the 1/sqrt(head_size) scale folded into Wq.
    """
    scale = jnp.asarray(head_size ** -0.5, wq.dtype)
    w_qkv = jnp.concatenate([wq * scale, wk, wv], axis=1)      # (C, 3H)
    wp3 = wp.reshape(n_heads, head_size, wp.shape[1])          # (nh, hs, C)
    return w_qkv, wp3, bp


def multi_head_attention_fused(x, w_qkv, wp3, bp, *, n_heads=N_HEADS, head_size=HEAD_SIZE):
    """x: (B, T, C); fused params from prepare_mha_params(). Returns (B, T, C)."""
    B, T, C = x.shape
    H = n_heads * head_size

    kern = functools.partial(_mha_kernel, n_heads=n_heads, head_size=head_size)
    return pl.pallas_call(
        kern,
        out_shape=jax.ShapeDtypeStruct((B, T, C), x.dtype),
        grid=(1,),                                              # single step: whole batch
        in_specs=[
            pl.BlockSpec((B, T, C), lambda i: (0, 0, 0)),                  # x (full)
            pl.BlockSpec((C, 3 * H), lambda i: (0, 0)),                    # fused Wqkv
            pl.BlockSpec((n_heads, head_size, C), lambda i: (0, 0, 0)),    # Wproj per head
            pl.BlockSpec((1, C), lambda i: (0, 0)),                        # bproj
        ],
        out_specs=pl.BlockSpec((B, T, C), lambda i: (0, 0, 0)),
        compiler_params=pltpu.CompilerParams(
            dimension_semantics=("arbitrary",)),
    )(x, w_qkv, wp3, bp)


def multi_head_attention(x, wq, wk, wv, wp, bp, *, n_heads=N_HEADS, head_size=HEAD_SIZE):
    """Convenience wrapper (fuses params every call). Prefer calling
    prepare_mha_params() once and multi_head_attention_fused() per forward."""
    w_qkv, wp3, bp = prepare_mha_params(wq, wk, wv, wp, bp,
                                        n_heads=n_heads, head_size=head_size)
    return multi_head_attention_fused(x, w_qkv, wp3, bp,
                                      n_heads=n_heads, head_size=head_size)


def _reference(x, wq, wk, wv, wp, bp, *, n_heads=N_HEADS, head_size=HEAD_SIZE):
    # Pure-JAX reference mirroring the PyTorch forward (eval mode).
    q = x @ wq
    k = x @ wk
    v = x @ wv
    B, T, _ = x.shape
    mask = jnp.tril(jnp.ones((T, T), dtype=bool))
    outs = []
    for h in range(n_heads):
        sl = slice(h * head_size, (h + 1) * head_size)
        wei = (q[..., sl] @ jnp.swapaxes(k[..., sl], -1, -2)) * (head_size ** -0.5)
        wei = jnp.where(mask, wei, -jnp.inf)
        wei = jax.nn.softmax(wei, axis=-1)
        outs.append(wei @ v[..., sl])
    cat = jnp.concatenate(outs, axis=-1)
    return cat @ wp + bp[0]


if __name__ == "__main__":
    B, T, C = 2, 8, N_EMBED
    H = N_HEADS * HEAD_SIZE

    key = jax.random.PRNGKey(0)
    kx, kq, kk, kv, kp, kb = jax.random.split(key, 6)

    # Deterministic parameter init (PyTorch Linear default: U(-1/sqrt(fan_in), +1/sqrt(fan_in))).
    lim_in = 1.0 / (C ** 0.5)
    lim_proj = 1.0 / (H ** 0.5)
    x = jax.random.normal(kx, (B, T, C), dtype=jnp.float32)
    wq = jax.random.uniform(kq, (C, H), jnp.float32, -lim_in, lim_in)
    wk = jax.random.uniform(kk, (C, H), jnp.float32, -lim_in, lim_in)
    wv = jax.random.uniform(kv, (C, H), jnp.float32, -lim_in, lim_in)
    wp = jax.random.uniform(kp, (H, C), jnp.float32, -lim_proj, lim_proj)
    bp = jax.random.uniform(kb, (1, C), jnp.float32, -lim_proj, lim_proj)

    # Weight fusion hoisted out of the forward path (done once, at init).
    w_qkv, wp3, bp_f = prepare_mha_params(wq, wk, wv, wp, bp)

    out = multi_head_attention_fused(x, w_qkv, wp3, bp_f)
    out = jax.block_until_ready(out)

    ref = _reference(x, wq, wk, wv, wp, bp)
    assert out.shape == (B, T, C)
    assert jnp.allclose(out, ref, atol=1e-4, rtol=1e-4), "mismatch vs reference"

    print("KERNEL_OK")
</pallas_src>

<mosaic_0001>
module attributes {stable_mosaic.version = 11 : i64} {
  func.func @_mha_kernel(%arg0: i32, %arg1: memref<2x8x32xf32, #tpu.memory_space<vmem>>, %arg2: memref<32x96xf32, #tpu.memory_space<vmem>>, %arg3: memref<4x8x32xf32, #tpu.memory_space<vmem>>, %arg4: memref<1x32xf32, #tpu.memory_space<vmem>>, %arg5: memref<2x8x32xf32, #tpu.memory_space<vmem>>) attributes {dimension_semantics = [#tpu.dimension_semantics<arbitrary>], iteration_bounds = array<i64: 1>, scalar_prefetch = 0 : i64, scratch_operands = 0 : i64, tpu.core_type = #tpu.core_type<tc>, window_params = [{pipeline_mode = #tpu.pipeline_mode<synchronous>, transform_indices = @transform_0, window_bounds = array<i64: 2, 8, 32>}, {pipeline_mode = #tpu.pipeline_mode<synchronous>, transform_indices = @transform_1, window_bounds = array<i64: 32, 96>}, {pipeline_mode = #tpu.pipeline_mode<synchronous>, transform_indices = @transform_2, window_bounds = array<i64: 4, 8, 32>}, {pipeline_mode = #tpu.pipeline_mode<synchronous>, transform_indices = @transform_3, window_bounds = array<i64: 1, 32>}, {pipeline_mode = #tpu.pipeline_mode<synchronous>, transform_indices = @transform_4, window_bounds = array<i64: 2, 8, 32>}]} {
    %c0 = arith.constant 0 : index
    %c0_0 = arith.constant 0 : index
    %c0_1 = arith.constant 0 : index
    %0 = vector.load %arg1[%c0, %c0_0, %c0_1] : memref<2x8x32xf32, #tpu.memory_space<vmem>>, vector<2x8x32xf32>
    %1 = vector.shape_cast %0 : vector<2x8x32xf32> to vector<16x32xf32>
    %c0_2 = arith.constant 0 : index
    %c0_3 = arith.constant 0 : index
    %2 = vector.load %arg2[%c0_2, %c0_3] : memref<32x96xf32, #tpu.memory_space<vmem>>, vector<32x96xf32>
    %cst = arith.constant dense<0.000000e+00> : vector<16x96xf32>
    %3 = tpu.matmul %1, %2, %cst {dimension_numbers = #tpu.dot_dimension_numbers<[1], [0], [0], [1], [0, 0, 1, 1], [], []>} : vector<16x32xf32>, vector<32x96xf32>, vector<16x96xf32> -> vector<16x96xf32>
    %4 = vector.shape_cast %3 : vector<16x96xf32> to vector<2x8x96xf32>
    %5 = vector.extract_strided_slice %4 {offsets = [0, 0, 0], sizes = [2, 8, 32], strides = [1, 1, 1]} : vector<2x8x96xf32> to vector<2x8x32xf32>
    %6 = vector.extract_strided_slice %4 {offsets = [0, 0, 32], sizes = [2, 8, 32], strides = [1, 1, 1]} : vector<2x8x96xf32> to vector<2x8x32xf32>
    %7 = vector.extract_strided_slice %4 {offsets = [0, 0, 64], sizes = [2, 8, 32], strides = [1, 1, 1]} : vector<2x8x96xf32> to vector<2x8x32xf32>
    %8 = vector.extract_strided_slice %5 {offsets = [0, 0, 0], sizes = [2, 8, 8], strides = [1, 1, 1]} : vector<2x8x32xf32> to vector<2x8x8xf32>
    %9 = vector.extract_strided_slice %5 {offsets = [0, 0, 8], sizes = [2, 8, 8], strides = [1, 1, 1]} : vector<2x8x32xf32> to vector<2x8x8xf32>
    %10 = vector.extract_strided_slice %5 {offsets = [0, 0, 16], sizes = [2, 8, 8], strides = [1, 1, 1]} : vector<2x8x32xf32> to vector<2x8x8xf32>
    %11 = vector.extract_strided_slice %5 {offsets = [0, 0, 24], sizes = [2, 8, 8], strides = [1, 1, 1]} : vector<2x8x32xf32> to vector<2x8x8xf32>
    %12 = tpu.concatenate %8, %9, %10, %11 in 0 : vector<2x8x8xf32>, vector<2x8x8xf32>, vector<2x8x8xf32>, vector<2x8x8xf32> -> vector<8x8x8xf32>
    %13 = vector.extract_strided_slice %6 {offsets = [0, 0, 0], sizes = [2, 8, 8], strides = [1, 1, 1]} : vector<2x8x32xf32> to vector<2x8x8xf32>
    %14 = vector.extract_strided_slice %6 {offsets = [0, 0, 8], sizes = [2, 8, 8], strides = [1, 1, 1]} : vector<2x8x32xf32> to vector<2x8x8xf32>
    %15 = vector.extract_strided_slice %6 {offsets = [0, 0, 16], sizes = [2, 8, 8], strides = [1, 1, 1]} : vector<2x8x32xf32> to vector<2x8x8xf32>
    %16 = vector.extract_strided_slice %6 {offsets = [0, 0, 24], sizes = [2, 8, 8], strides = [1, 1, 1]} : vector<2x8x32xf32> to vector<2x8x8xf32>
    %17 = tpu.concatenate %13, %14, %15, %16 in 0 : vector<2x8x8xf32>, vector<2x8x8xf32>, vector<2x8x8xf32>, vector<2x8x8xf32> -> vector<8x8x8xf32>
    %18 = vector.extract_strided_slice %7 {offsets = [0, 0, 0], sizes = [2, 8, 8], strides = [1, 1, 1]} : vector<2x8x32xf32> to vector<2x8x8xf32>
    %19 = vector.extract_strided_slice %7 {offsets = [0, 0, 8], sizes = [2, 8, 8], strides = [1, 1, 1]} : vector<2x8x32xf32> to vector<2x8x8xf32>
    %20 = vector.extract_strided_slice %7 {offsets = [0, 0, 16], sizes = [2, 8, 8], strides = [1, 1, 1]} : vector<2x8x32xf32> to vector<2x8x8xf32>
    %21 = vector.extract_strided_slice %7 {offsets = [0, 0, 24], sizes = [2, 8, 8], strides = [1, 1, 1]} : vector<2x8x32xf32> to vector<2x8x8xf32>
    %22 = tpu.concatenate %18, %19, %20, %21 in 0 : vector<2x8x8xf32>, vector<2x8x8xf32>, vector<2x8x8xf32>, vector<2x8x8xf32> -> vector<8x8x8xf32>
    %23 = tpu.iota {dimensions = array<i32: 0>} : vector<8x8xi32>
    %24 = tpu.iota {dimensions = array<i32: 1>} : vector<8x8xi32>
    %25 = arith.cmpi sge, %23, %24 : vector<8x8xi32>
    %26 = vector.shape_cast %25 : vector<8x8xi1> to vector<1x8x8xi1>
    "tpu.trace_start"() <{level = 10 : i32, message = "bqd,bkd->bqk"}> : () -> ()
    %cst_4 = arith.constant dense<0.000000e+00> : vector<8x8x8xf32>
    %27 = tpu.matmul %12, %17, %cst_4 {dimension_numbers = #tpu.dot_dimension_numbers<[2], [2], [1], [1], [0, 0, 0, 1, 1, 1], [0], [0]>} : vector<8x8x8xf32>, vector<8x8x8xf32>, vector<8x8x8xf32> -> vector<8x8x8xf32>
    %cst_5 = arith.constant -1.000000e+30 : f32
    "tpu.trace_stop"() : () -> ()
    %28 = vector.shape_cast %26 : vector<1x8x8xi1> to vector<1x8x8xi1>
    %29 = vector.broadcast %28 : vector<1x8x8xi1> to vector<8x8x8xi1>
    %30 = vector.broadcast %cst_5 : f32 to vector<8x8x8xf32>
    %31 = arith.select %29, %27, %30 : vector<8x8x8xi1>, vector<8x8x8xf32>
    %cst_6 = arith.constant dense<0xFF800000> : vector<8x8xf32>
    %32 = vector.multi_reduction <maximumf>, %31, %cst_6 [2] : vector<8x8x8xf32> to vector<8x8xf32>
    %33 = vector.shape_cast %32 : vector<8x8xf32> to vector<8x8x1xf32>
    %34 = vector.broadcast %33 : vector<8x8x1xf32> to vector<8x8x8xf32>
    %35 = arith.subf %31, %34 : vector<8x8x8xf32>
    %36 = math.exp %35 : vector<8x8x8xf32>
    %cst_7 = arith.constant dense<0.000000e+00> : vector<8x8xf32>
    %37 = vector.multi_reduction <add>, %36, %cst_7 [2] : vector<8x8x8xf32> to vector<8x8xf32>
    %38 = vector.shape_cast %37 : vector<8x8xf32> to vector<8x8x1xf32>
    "tpu.trace_start"() <{level = 10 : i32, message = "bqk,bkd->bqd"}> : () -> ()
    %cst_8 = arith.constant dense<0.000000e+00> : vector<8x8x8xf32>
    %39 = tpu.matmul %36, %22, %cst_8 {dimension_numbers = #tpu.dot_dimension_numbers<[2], [1], [1], [2], [0, 0, 0, 1, 1, 2], [0], [0]>} : vector<8x8x8xf32>, vector<8x8x8xf32>, vector<8x8x8xf32> -> vector<8x8x8xf32>
    "tpu.trace_stop"() : () -> ()
    %cst_9 = arith.constant 1.000000e+00 : f32
    %40 = vector.broadcast %cst_9 : f32 to vector<8x8x1xf32>
    %41 = arith.divf %40, %38 : vector<8x8x1xf32>
    %42 = vector.broadcast %41 : vector<8x8x1xf32> to vector<8x8x8xf32>
    %43 = arith.mulf %39, %42 : vector<8x8x8xf32>
    %cst_10 = arith.constant 0.000000e+00 : f32
    %44 = vector.broadcast %cst_10 : f32 to vector<16x32xf32>
    %45 = vector.extract_strided_slice %43 {offsets = [0, 0, 0], sizes = [2, 8, 8], strides = [1, 1, 1]} : vector<8x8x8xf32> to vector<2x8x8xf32>
    %46 = vector.shape_cast %45 : vector<2x8x8xf32> to vector<16x8xf32>
    %c0_11 = arith.constant 0 : index
    %c0_12 = arith.constant 0 : index
    %c0_13 = arith.constant 0 : index
    %47 = vector.load %arg3[%c0_11, %c0_12, %c0_13] : memref<4x8x32xf32, #tpu.memory_space<vmem>>, vector<1x8x32xf32>
    %48 = vector.shape_cast %47 : vector<1x8x32xf32> to vector<8x32xf32>
    %cst_14 = arith.constant dense<0.000000e+00> : vector<16x32xf32>
    %49 = tpu.matmul %46, %48, %cst_14 {dimension_numbers = #tpu.dot_dimension_numbers<[1], [0], [0], [1], [0, 0, 1, 1], [], []>} : vector<16x8xf32>, vector<8x32xf32>, vector<16x32xf32> -> vector<16x32xf32>
    %50 = arith.addf %44, %49 : vector<16x32xf32>
    %51 = vector.extract_strided_slice %43 {offsets = [2, 0, 0], sizes = [2, 8, 8], strides = [1, 1, 1]} : vector<8x8x8xf32> to vector<2x8x8xf32>
    %52 = vector.shape_cast %51 : vector<2x8x8xf32> to vector<16x8xf32>
    %c1 = arith.constant 1 : index
    %c0_15 = arith.constant 0 : index
    %c0_16 = arith.constant 0 : index
    %53 = vector.load %arg3[%c1, %c0_15, %c0_16] : memref<4x8x32xf32, #tpu.memory_space<vmem>>, vector<1x8x32xf32>
    %54 = vector.shape_cast %53 : vector<1x8x32xf32> to vector<8x32xf32>
    %cst_17 = arith.constant dense<0.000000e+00> : vector<16x32xf32>
    %55 = tpu.matmul %52, %54, %cst_17 {dimension_numbers = #tpu.dot_dimension_numbers<[1], [0], [0], [1], [0, 0, 1, 1], [], []>} : vector<16x8xf32>, vector<8x32xf32>, vector<16x32xf32> -> vector<16x32xf32>
    %56 = arith.addf %50, %55 : vector<16x32xf32>
    %57 = vector.extract_strided_slice %43 {offsets = [4, 0, 0], sizes = [2, 8, 8], strides = [1, 1, 1]} : vector<8x8x8xf32> to vector<2x8x8xf32>
    %58 = vector.shape_cast %57 : vector<2x8x8xf32> to vector<16x8xf32>
    %c2 = arith.constant 2 : index
    %c0_18 = arith.constant 0 : index
    %c0_19 = arith.constant 0 : index
    %59 = vector.load %arg3[%c2, %c0_18, %c0_19] : memref<4x8x32xf32, #tpu.memory_space<vmem>>, vector<1x8x32xf32>
    %60 = vector.shape_cast %59 : vector<1x8x32xf32> to vector<8x32xf32>
    %cst_20 = arith.constant dense<0.000000e+00> : vector<16x32xf32>
    %61 = tpu.matmul %58, %60, %cst_20 {dimension_numbers = #tpu.dot_dimension_numbers<[1], [0], [0], [1], [0, 0, 1, 1], [], []>} : vector<16x8xf32>, vector<8x32xf32>, vector<16x32xf32> -> vector<16x32xf32>
    %62 = arith.addf %56, %61 : vector<16x32xf32>
    %63 = vector.extract_strided_slice %43 {offsets = [6, 0, 0], sizes = [2, 8, 8], strides = [1, 1, 1]} : vector<8x8x8xf32> to vector<2x8x8xf32>
    %64 = vector.shape_cast %63 : vector<2x8x8xf32> to vector<16x8xf32>
    %c3 = arith.constant 3 : index
    %c0_21 = arith.constant 0 : index
    %c0_22 = arith.constant 0 : index
    %65 = vector.load %arg3[%c3, %c0_21, %c0_22] : memref<4x8x32xf32, #tpu.memory_space<vmem>>, vector<1x8x32xf32>
    %66 = vector.shape_cast %65 : vector<1x8x32xf32> to vector<8x32xf32>
    %cst_23 = arith.constant dense<0.000000e+00> : vector<16x32xf32>
    %67 = tpu.matmul %64, %66, %cst_23 {dimension_numbers = #tpu.dot_dimension_numbers<[1], [0], [0], [1], [0, 0, 1, 1], [], []>} : vector<16x8xf32>, vector<8x32xf32>, vector<16x32xf32> -> vector<16x32xf32>
    %68 = arith.addf %62, %67 : vector<16x32xf32>
    %c0_24 = arith.constant 0 : index
    %c0_25 = arith.constant 0 : index
    %69 = vector.load %arg4[%c0_24, %c0_25] : memref<1x32xf32, #tpu.memory_space<vmem>>, vector<1x32xf32>
    %70 = vector.broadcast %69 : vector<1x32xf32> to vector<16x32xf32>
    %71 = arith.addf %68, %70 : vector<16x32xf32>
    %72 = vector.shape_cast %71 : vector<16x32xf32> to vector<2x8x32xf32>
    %c0_26 = arith.constant 0 : index
    %c0_27 = arith.constant 0 : index
    %c0_28 = arith.constant 0 : index
    %73 = vector.load %arg5[%c0_26, %c0_27, %c0_28] : memref<2x8x32xf32, #tpu.memory_space<vmem>>, vector<2x8x32xf32>
    tpu.vector_store %arg5[%c0_26, %c0_27, %c0_28], %72 {strides = array<i32>} : memref<2x8x32xf32, #tpu.memory_space<vmem>>, vector<2x8x32xf32>,
    return
  }
  func.func @transform_0(%arg0: i32) -> (i32, i32, i32) {
    %c0_i32 = arith.constant 0 : i32
    %c0_i32_0 = arith.constant 0 : i32
    %c0_i32_1 = arith.constant 0 : i32
    %c0_i32_2 = arith.constant 0 : i32
    return %c0_i32, %c0_i32_0, %c0_i32_1 : i32, i32, i32
  }
  func.func @transform_1(%arg0: i32) -> (i32, i32) {
    %c0_i32 = arith.constant 0 : i32
    %c0_i32_0 = arith.constant 0 : i32
    %c0_i32_1 = arith.constant 0 : i32
    return %c0_i32, %c0_i32_0 : i32, i32
  }
  func.func @transform_2(%arg0: i32) -> (i32, i32, i32) {
    %c0_i32 = arith.constant 0 : i32
    %c0_i32_0 = arith.constant 0 : i32
    %c0_i32_1 = arith.constant 0 : i32
    %c0_i32_2 = arith.constant 0 : i32
    return %c0_i32, %c0_i32_0, %c0_i32_1 : i32, i32, i32
  }
  func.func @transform_3(%arg0: i32) -> (i32, i32) {
    %c0_i32 = arith.constant 0 : i32
    %c0_i32_0 = arith.constant 0 : i32
    %c0_i32_1 = arith.constant 0 : i32
    return %c0_i32, %c0_i32_0 : i32, i32
  }
  func.func @transform_4(%arg0: i32) -> (i32, i32, i32) {
    %c0_i32 = arith.constant 0 : i32
    %c0_i32_0 = arith.constant 0 : i32
    %c0_i32_1 = arith.constant 0 : i32
    %c0_i32_2 = arith.constant 0 : i32
    return %c0_i32, %c0_i32_0, %c0_i32_1 : i32, i32, i32
  }
}

</mosaic_0001>

<llo_original>
// kernel: tpu_custom_call.1
$region0: #{tpu_custom_call.1}
  #allocation0 [shape = 'u32[]', space=smem, size = 0x4, offset = 0x4, fixed_abs, tag = 'smem constant byte address 0x4 - core index']
  #allocation1 [shape = 'u32[144,128]{1,0:T(1,128)}', space=vmem, size = 0x12000, scoped, tag = 'internal scratch']
  %s0 = inlined_call_operand.hbm [shape: f32[2,8,32], index: 0, kind: input, shape index: {}]
  %s1 = inlined_call_operand.hbm [shape: f32[32,96], index: 1, kind: input, shape index: {}]
  %s2 = inlined_call_operand.hbm [shape: f32[4,8,32], index: 2, kind: input, shape index: {}]
  %s3 = inlined_call_operand.vmem [shape: f32[1,32], index: 3, kind: input, shape index: {}]
  %s4 = inlined_call_operand.hbm [shape: f32[2,8,32], index: 4, kind: output, shape index: {}]
  %s5 = sld [smem:[#allocation0]]
  $region38: #{tpu_custom_call.1} parent=0
    _
  %s7 = ssub.s32 1, %s5
  %s8 = scalar_select 0, %s7, %s5
  $region1: #{tpu_custom_call.1} parent=0
    #allocation2 [shape = 'u8[8192]{0}', space=vmem, size = 0x2000, scoped, tag = 'input window, operand 0, single buffered']
    #allocation3 [shape = 's32[1]{0}', space=sflag, size = 0x4, scoped, tag = 'scoped memory for tpu_custom_call.1']
    #allocation4 [shape = 's32[1]{0}', space=sflag, size = 0x4, scoped, tag = 'scoped memory for tpu_custom_call.1']
    #allocation5 [shape = 'u8[16384]{0}', space=vmem, size = 0x4000, scoped, tag = 'input window, operand 1, single buffered']
    #allocation6 [shape = 's32[1]{0}', space=sflag, size = 0x4, scoped, tag = 'scoped memory for tpu_custom_call.1']
    #allocation7 [shape = 'u8[16384]{0}', space=vmem, size = 0x4000, scoped, tag = 'input window, operand 2, single buffered']
    #allocation8 [shape = 'u8[8192]{0}', space=vmem, size = 0x2000, scoped, tag = 'output window, operand 0, single buffered']
    %9 = vsyncpa [#allocation3], 0
    %10 = vsyncpa [#allocation6], 0
    %11 = vsyncpa [#allocation4], 0
    // Predicated region
    $region2: #{tpu_custom_call.1} parent=1 // pred_check
      _
    $region3: #{tpu_custom_call.1} parent=1 // pred_check_branch
      %13 = sbr.rel (0) target = $region5
    $region4: #{tpu_custom_call.1} parent=1 // pred_region
      %s15 = ssub.s32 256, 256
      %16 = vsyncadd [#allocation3], %s15
      %s17 = sshll.u32 [#allocation2], 4
      %s18 = int_to_ptr.vmem [resolvable:$true] %s17
      %23 = dma.hbm_to_vmem [thread:$0]  %s0, 256, %s18, [#allocation3], 128, 128, 8
    $region5: #{tpu_custom_call.1} parent=1 // pred_fallthru
      _
    // Predicated region
    $region6: #{tpu_custom_call.1} parent=1 // pred_check
      _
    $region7: #{tpu_custom_call.1} parent=1 // pred_check_branch
      %25 = sbr.rel (0) target = $region9
    $region8: #{tpu_custom_call.1} parent=1 // pred_region
      %s27 = ssub.s32 512, 512
      %28 = vsyncadd [#allocation6], %s27
      %s29 = sshll.u32 [#allocation5], 4
      %s30 = int_to_ptr.vmem [resolvable:$true] %s29
      %35 = dma.hbm_to_vmem [thread:$0]  %s1, 512, %s30, [#allocation6], 128, 128, 8
    $region9: #{tpu_custom_call.1} parent=1 // pred_fallthru
      _
    // Predicated region
    $region10: #{tpu_custom_call.1} parent=1 // pred_check
      _
    $region11: #{tpu_custom_call.1} parent=1 // pred_check_branch
      %37 = sbr.rel (0) target = $region13
    $region12: #{tpu_custom_call.1} parent=1 // pred_region
      %s39 = ssub.s32 512, 512
      %40 = vsyncadd [#allocation6], %s39
      %s41 = sshll.u32 [#allocation7], 4
      %s42 = int_to_ptr.vmem [resolvable:$true] %s41
      %47 = dma.hbm_to_vmem [thread:$0]  %s2, 512, %s42, [#allocation6], 128, 128, 8
    $region13: #{tpu_custom_call.1} parent=1 // pred_fallthru
      _
    // Predicated region
    $region14: #{tpu_custom_call.1} parent=1 // pred_check
      _
    $region15: #{tpu_custom_call.1} parent=1 // pred_check_branch
      %49 = sbr.rel (0) target = $region17
    $region16: #{tpu_custom_call.1} parent=1 // pred_region
      _
    $region17: #{tpu_custom_call.1} parent=1 // pred_fallthru
      _
    // Predicated region
    $region18: #{tpu_custom_call.1} parent=1 // pred_check
      _
    $region19: #{tpu_custom_call.1} parent=1 // pred_check_branch
      %51 = sbr.rel (0) target = $region21
    $region20: #{tpu_custom_call.1} parent=1 // pred_region
      %52 = dma.done [#allocation3], 256
    $region21: #{tpu_custom_call.1} parent=1 // pred_fallthru
      _
    // Predicated region
    $region22: #{tpu_custom_call.1} parent=1 // pred_check
      _
    $region23: #{tpu_custom_call.1} parent=1 // pred_check_branch
      %54 = sbr.rel (0) target = $region25
    $region24: #{tpu_custom_call.1} parent=1 // pred_region
      %55 = dma.done [#allocation6], 512
    $region25: #{tpu_custom_call.1} parent=1 // pred_fallthru
      _
    // Predicated region
    $region26: #{tpu_custom_call.1} parent=1 // pred_check
      _
    $region27: #{tpu_custom_call.1} parent=1 // pred_check_branch
      %57 = sbr.rel (0) target = $region29
    $region28: #{tpu_custom_call.1} parent=1 // pred_region
      %58 = dma.done [#allocation6], 512
    $region29: #{tpu_custom_call.1} parent=1 // pred_fallthru
      _
    %v59 = vld [vmem:[#allocation2] sm:$0xff]
    %v60 = vld [vmem:[#allocation2 + $0x8] sm:$0xff]
    %v61 = vld [vmem:[#allocation5] sm:$0xff]
    %v62 = vld [vmem:[#allocation5 + $0x8] sm:$0xff]
    %v63 = vld [vmem:[#allocation5 + $0x10] sm:$0xff]
    %v64 = vld [vmem:[#allocation5 + $0x18] sm:$0xff]
    %vm65 = vcmask 261120
    %v67 = vsel %vm65, %v59, 0
    %v70 = vsel %vm65, %v60, 0
    %72 = vmatprep.subr.mxu0 0.0
    %73 = vmatpush1.msra.mxu0 %v61
    %74 = vmatprep.subr.mxu0 0.0
    %75 = vmatpush1.msra.mxu0 %v62
    %76 = vmatprep.subr.mxu0 0.0
    %77 = vmatpush1.msra.mxu0 %v63
    %78 = vmatprep.subr.mxu0 0.0
    %79 = vmatpush1.msra.mxu0 %v64
    %80 = vmatprep.subr.mxu0 0.0
    %81 = vmatpush1.msra.mxu0 0.0
    %82 = vmatprep.subr.mxu0 0.0
    %83 = vmatpush1.msra.mxu0 0.0
    %84 = vmatprep.subr.mxu0 0.0
    %85 = vmatpush1.msra.mxu0 0.0
    %86 = vmatprep.subr.mxu0 0.0
    %87 = vmatpush1.msra.mxu0 0.0
    %88 = vmatprep.subr.mxu0 0.0
    %89 = vmatpush1.msra.mxu0 0.0
    %90 = vmatprep.subr.mxu0 0.0
    %91 = vmatpush1.msra.mxu0 0.0
    %92 = vmatprep.subr.mxu0 0.0
    %93 = vmatpush1.msra.mxu0 0.0
    %94 = vmatprep.subr.mxu0 0.0
    %95 = vmatpush1.msra.mxu0 0.0
    %96 = vmatprep.subr.mxu0 0.0
    %97 = vmatpush1.msra.mxu0 0.0
    %98 = vmatprep.subr.mxu0 0.0
    %99 = vmatpush1.msra.mxu0 0.0
    %100 = vmatprep.subr.mxu0 0.0
    %101 = vmatpush1.msra.mxu0 0.0
    %102 = vmatprep.subr.mxu0 0.0
    %103 = vmatpush1.msra.mxu0 0.0
    %104 = vmatprep.subr.mxu0 0.0
    %105 = vmatpush1.msra.mxu0 0.0
    %106 = vmatprep.subr.mxu0 0.0
    %107 = vmatpush1.msra.mxu0 0.0
    %108 = vmatprep.subr.mxu0 0.0
    %109 = vmatpush1.msra.mxu0 0.0
    %110 = vmatprep.subr.mxu0 0.0
    %111 = vmatpush1.msra.mxu0 0.0
    %112 = vmatprep.subr.mxu0 0.0
    %113 = vmatpush1.msra.mxu0 0.0
    %114 = vmatprep.subr.mxu0 0.0
    %115 = vmatpush1.msra.mxu0 0.0
    %116 = vmatprep.subr.mxu0 0.0
    %117 = vmatpush1.msra.mxu0 0.0
    %118 = vmatprep.subr.mxu0 0.0
    %119 = vmatpush1.msra.mxu0 0.0
    %120 = vmatprep.subr.mxu0 0.0
    %121 = vmatpush1.msra.mxu0 0.0
    %122 = vmatprep.subr.mxu0 0.0
    %123 = vmatpush1.msra.mxu0 0.0
    %124 = vmatprep.subr.mxu0 0.0
    %125 = vmatpush1.msra.mxu0 0.0
    %126 = vmatprep.subr.mxu0 0.0
    %127 = vmatpush1.msra.mxu0 0.0
    %128 = vmatprep.subr.mxu0 0.0
    %129 = vmatpush1.msra.mxu0 0.0
    %130 = vmatprep.subr.mxu0 0.0
    %131 = vmatpush1.msra.mxu0 0.0
    %132 = vmatprep.subr.mxu0 0.0
    %133 = vmatpush1.msra.mxu0 0.0
    %134 = vmatprep.subr.mxu0 0.0
    %135 = vmatpush1.msra.mxu0 0.0
    %136 = vmatprep.mubr.f32.mxu0 0.0
    %137 = vmatmul.mubr.f32.gmra.mrb[0].mxu0 %v67
    %v138 = vpop.f32.mrb[0].mxu0
    %v139 = vadd.f32 0.0, %v138
    %v140 = vpop.f32.mrb[0].mxu0
    %141 = vmatprep.mubr.f32.mxu0 0.0
    %142 = vmatmul.mubr.f32.gmra.mrb[0].mxu0 %v70
    %v143 = vpop.f32.mrb[0].mxu0
    %v144 = vadd.f32 0.0, %v143
    %v145 = vpop.f32.mrb[0].mxu0
    %146 = vdwg.mxu0
    %149 = vrot.lane.b32.xlu0 %v139, 120
    %v150 = vpop.permute.xlu0 %149
    %151 = vrot.lane.b32.xlu0 %v144, 120
    %v152 = vpop.permute.xlu0 %151
    %153 = vrot.lane.b32.xlu0 %v139, 112
    %v154 = vpop.permute.xlu0 %153
    %155 = vrot.lane.b32.xlu0 %v144, 112
    %v156 = vpop.permute.xlu0 %155
    %157 = vrot.lane.b32.xlu0 %v139, 104
    %v158 = vpop.permute.xlu0 %157
    %159 = vrot.lane.b32.xlu0 %v144, 104
    %v160 = vpop.permute.xlu0 %159
    %v161 = vlaneseq
    %v162 = vshrl.u32 %v161, 7
    %v163 = vlaneseq
    %v164 = vand.u32 %v163, 127
    %vm165 = vcmp.ge.s32.totalorder %v162, %v164
    %166 = vrot.lane.b32.xlu0 %v139, 96
    %v167 = vpop.permute.xlu0 %166
    %vm168 = vcmask 64512
    %v169 = vsel %vm168, %v139, 0
    %v171 = vsel %vm168, %v167, 0
    %173 = vmatprep.subr.mxu0 0.0
    %174 = vmatpush1.xpose.msra.mxu0 %v171
    %175 = vmatprep.subr.mxu0 0.0
    %176 = vmatpush1.xpose.msra.mxu0 0.0
    %177 = vmatprep.subr.mxu0 0.0
    %178 = vmatpush1.xpose.msra.mxu0 0.0
    %179 = vmatprep.subr.mxu0 0.0
    %180 = vmatpush1.xpose.msra.mxu0 0.0
    %181 = vmatprep.subr.mxu0 0.0
    %182 = vmatpush1.xpose.msra.mxu0 0.0
    %183 = vmatprep.subr.mxu0 0.0
    %184 = vmatpush1.xpose.msra.mxu0 0.0
    %185 = vmatprep.subr.mxu0 0.0
    %186 = vmatpush1.xpose.msra.mxu0 0.0
    %187 = vmatprep.subr.mxu0 0.0
    %188 = vmatpush1.xpose.msra.mxu0 0.0
    %189 = vmatprep.subr.mxu0 0.0
    %190 = vmatpush1.xpose.msra.mxu0 0.0
    %191 = vmatprep.subr.mxu0 0.0
    %192 = vmatpush1.xpose.msra.mxu0 0.0
    %193 = vmatprep.subr.mxu0 0.0
    %194 = vmatpush1.xpose.msra.mxu0 0.0
    %195 = vmatprep.subr.mxu0 0.0
    %196 = vmatpush1.xpose.msra.mxu0 0.0
    %197 = vmatprep.subr.mxu0 0.0
    %198 = vmatpush1.xpose.msra.mxu0 0.0
    %199 = vmatprep.subr.mxu0 0.0
    %200 = vmatpush1.xpose.msra.mxu0 0.0
    %201 = vmatprep.subr.mxu0 0.0
    %202 = vmatpush1.xpose.msra.mxu0 0.0
    %203 = vmatprep.subr.mxu0 0.0
    %204 = vmatpush1.xpose.msra.mxu0 0.0
    %205 = vmatprep.subr.mxu0 0.0
    %206 = vmatpush1.xpose.msra.mxu0 0.0
    %207 = vmatprep.subr.mxu0 0.0
    %208 = vmatpush1.xpose.msra.mxu0 0.0
    %209 = vmatprep.subr.mxu0 0.0
    %210 = vmatpush1.xpose.msra.mxu0 0.0
    %211 = vmatprep.subr.mxu0 0.0
    %212 = vmatpush1.xpose.msra.mxu0 0.0
    %213 = vmatprep.subr.mxu0 0.0
    %214 = vmatpush1.xpose.msra.mxu0 0.0
    %215 = vmatprep.subr.mxu0 0.0
    %216 = vmatpush1.xpose.msra.mxu0 0.0
    %217 = vmatprep.subr.mxu0 0.0
    %218 = vmatpush1.xpose.msra.mxu0 0.0
    %219 = vmatprep.subr.mxu0 0.0
    %220 = vmatpush1.xpose.msra.mxu0 0.0
    %221 = vmatprep.subr.mxu0 0.0
    %222 = vmatpush1.xpose.msra.mxu0 0.0
    %223 = vmatprep.subr.mxu0 0.0
    %224 = vmatpush1.xpose.msra.mxu0 0.0
    %225 = vmatprep.subr.mxu0 0.0
    %226 = vmatpush1.xpose.msra.mxu0 0.0
    %227 = vmatprep.subr.mxu0 0.0
    %228 = vmatpush1.xpose.msra.mxu0 0.0
    %229 = vmatprep.subr.mxu0 0.0
    %230 = vmatpush1.xpose.msra.mxu0 0.0
    %231 = vmatprep.subr.mxu0 0.0
    %232 = vmatpush1.xpose.msra.mxu0 0.0
    %233 = vmatprep.subr.mxu0 0.0
    %234 = vmatpush1.xpose.msra.mxu0 0.0
    %235 = vmatprep.subr.mxu0 0.0
    %236 = vmatpush1.xpose.msra.mxu0 0.0
    %237 = vmatprep.mubr.f32.mxu0 0.0
    %238 = vmatmul.mubr.f32.gmra.mrb[0].mxu0 %v169
    %v239 = vpop.f32.mrb[0].mxu0
    %v240 = vadd.f32 0.0, %v239
    %v241 = vpop.f32.mrb[0].mxu0
    %242 = vdwg.mxu0
    %243 = vrot.lane.b32.xlu0 %v144, 96
    %v244 = vpop.permute.xlu0 %243
    %v245 = vsel %vm168, %v144, 0
    %v247 = vsel %vm168, %v244, 0
    %249 = vmatprep.subr.mxu0 0.0
    %250 = vmatpush1.xpose.msra.mxu0 %v247
    %251 = vmatprep.subr.mxu0 0.0
    %252 = vmatpush1.xpose.msra.mxu0 0.0
    %253 = vmatprep.subr.mxu0 0.0
    %254 = vmatpush1.xpose.msra.mxu0 0.0
    %255 = vmatprep.subr.mxu0 0.0
    %256 = vmatpush1.xpose.msra.mxu0 0.0
    %257 = vmatprep.subr.mxu0 0.0
    %258 = vmatpush1.xpose.msra.mxu0 0.0
    %259 = vmatprep.subr.mxu0 0.0
    %260 = vmatpush1.xpose.msra.mxu0 0.0
    %261 = vmatprep.subr.mxu0 0.0
    %262 = vmatpush1.xpose.msra.mxu0 0.0
    %263 = vmatprep.subr.mxu0 0.0
    %264 = vmatpush1.xpose.msra.mxu0 0.0
    %265 = vmatprep.subr.mxu0 0.0
    %266 = vmatpush1.xpose.msra.mxu0 0.0
    %267 = vmatprep.subr.mxu0 0.0
    %268 = vmatpush1.xpose.msra.mxu0 0.0
    %269 = vmatprep.subr.mxu0 0.0
    %270 = vmatpush1.xpose.msra.mxu0 0.0
    %271 = vmatprep.subr.mxu0 0.0
    %272 = vmatpush1.xpose.msra.mxu0 0.0
    %273 = vmatprep.subr.mxu0 0.0
    %274 = vmatpush1.xpose.msra.mxu0 0.0
    %275 = vmatprep.subr.mxu0 0.0
    %276 = vmatpush1.xpose.msra.mxu0 0.0
    %277 = vmatprep.subr.mxu0 0.0
    %278 = vmatpush1.xpose.msra.mxu0 0.0
    %279 = vmatprep.subr.mxu0 0.0
    %280 = vmatpush1.xpose.msra.mxu0 0.0
    %281 = vmatprep.subr.mxu0 0.0
    %282 = vmatpush1.xpose.msra.mxu0 0.0
    %283 = vmatprep.subr.mxu0 0.0
    %284 = vmatpush1.xpose.msra.mxu0 0.0
    %285 = vmatprep.subr.mxu0 0.0
    %286 = vmatpush1.xpose.msra.mxu0 0.0
    %287 = vmatprep.subr.mxu0 0.0
    %288 = vmatpush1.xpose.msra.mxu0 0.0
    %289 = vmatprep.subr.mxu0 0.0
    %290 = vmatpush1.xpose.msra.mxu0 0.0
    %291 = vmatprep.subr.mxu0 0.0
    %292 = vmatpush1.xpose.msra.mxu0 0.0
    %293 = vmatprep.subr.mxu0 0.0
    %294 = vmatpush1.xpose.msra.mxu0 0.0
    %295 = vmatprep.subr.mxu0 0.0
    %296 = vmatpush1.xpose.msra.mxu0 0.0
    %297 = vmatprep.subr.mxu0 0.0
    %298 = vmatpush1.xpose.msra.mxu0 0.0
    %299 = vmatprep.subr.mxu0 0.0
    %300 = vmatpush1.xpose.msra.mxu0 0.0
    %301 = vmatprep.subr.mxu0 0.0
    %302 = vmatpush1.xpose.msra.mxu0 0.0
    %303 = vmatprep.subr.mxu0 0.0
    %304 = vmatpush1.xpose.msra.mxu0 0.0
    %305 = vmatprep.subr.mxu0 0.0
    %306 = vmatpush1.xpose.msra.mxu0 0.0
    %307 = vmatprep.subr.mxu0 0.0
    %308 = vmatpush1.xpose.msra.mxu0 0.0
    %309 = vmatprep.subr.mxu0 0.0
    %310 = vmatpush1.xpose.msra.mxu0 0.0
    %311 = vmatprep.subr.mxu0 0.0
    %312 = vmatpush1.xpose.msra.mxu0 0.0
    %313 = vmatprep.mubr.f32.mxu0 0.0
    %314 = vmatmul.mubr.f32.gmra.mrb[0].mxu0 %v245
    %v315 = vpop.f32.mrb[0].mxu0
    %v316 = vadd.f32 0.0, %v315
    %v317 = vpop.f32.mrb[0].mxu0
    %318 = vdwg.mxu0
    %319 = vrot.lane.b32.xlu0 %v150, 96
    %v320 = vpop.permute.xlu0 %319
    %v321 = vsel %vm168, %v150, 0
    %v323 = vsel %vm168, %v320, 0
    %325 = vmatprep.subr.mxu0 0.0
    %326 = vmatpush1.xpose.msra.mxu0 %v323
    %327 = vmatprep.subr.mxu0 0.0
    %328 = vmatpush1.xpose.msra.mxu0 0.0
    %329 = vmatprep.subr.mxu0 0.0
    %330 = vmatpush1.xpose.msra.mxu0 0.0
    %331 = vmatprep.subr.mxu0 0.0
    %332 = vmatpush1.xpose.msra.mxu0 0.0
    %333 = vmatprep.subr.mxu0 0.0
    %334 = vmatpush1.xpose.msra.mxu0 0.0
    %335 = vmatprep.subr.mxu0 0.0
    %336 = vmatpush1.xpose.msra.mxu0 0.0
    %337 = vmatprep.subr.mxu0 0.0
    %338 = vmatpush1.xpose.msra.mxu0 0.0
    %339 = vmatprep.subr.mxu0 0.0
    %340 = vmatpush1.xpose.msra.mxu0 0.0
    %341 = vmatprep.subr.mxu0 0.0
    %342 = vmatpush1.xpose.msra.mxu0 0.0
    %343 = vmatprep.subr.mxu0 0.0
    %344 = vmatpush1.xpose.msra.mxu0 0.0
    %345 = vmatprep.subr.mxu0 0.0
    %346 = vmatpush1.xpose.msra.mxu0 0.0
    %347 = vmatprep.subr.mxu0 0.0
    %348 = vmatpush1.xpose.msra.mxu0 0.0
    %349 = vmatprep.subr.mxu0 0.0
    %350 = vmatpush1.xpose.msra.mxu0 0.0
    %351 = vmatprep.subr.mxu0 0.0
    %352 = vmatpush1.xpose.msra.mxu0 0.0
    %353 = vmatprep.subr.mxu0 0.0
    %354 = vmatpush1.xpose.msra.mxu0 0.0
    %355 = vmatprep.subr.mxu0 0.0
    %356 = vmatpush1.xpose.msra.mxu0 0.0
    %357 = vmatprep.subr.mxu0 0.0
    %358 = vmatpush1.xpose.msra.mxu0 0.0
    %359 = vmatprep.subr.mxu0 0.0
    %360 = vmatpush1.xpose.msra.mxu0 0.0
    %361 = vmatprep.subr.mxu0 0.0
    %362 = vmatpush1.xpose.msra.mxu0 0.0
    %363 = vmatprep.subr.mxu0 0.0
    %364 = vmatpush1.xpose.msra.mxu0 0.0
    %365 = vmatprep.subr.mxu0 0.0
    %366 = vmatpush1.xpose.msra.mxu0 0.0
    %367 = vmatprep.subr.mxu0 0.0
    %368 = vmatpush1.xpose.msra.mxu0 0.0
    %369 = vmatprep.subr.mxu0 0.0
    %370 = vmatpush1.xpose.msra.mxu0 0.0
    %371 = vmatprep.subr.mxu0 0.0
    %372 = vmatpush1.xpose.msra.mxu0 0.0
    %373 = vmatprep.subr.mxu0 0.0
    %374 = vmatpush1.xpose.msra.mxu0 0.0
    %375 = vmatprep.subr.mxu0 0.0
    %376 = vmatpush1.xpose.msra.mxu0 0.0
    %377 = vmatprep.subr.mxu0 0.0
    %378 = vmatpush1.xpose.msra.mxu0 0.0
    %379 = vmatprep.subr.mxu0 0.0
    %380 = vmatpush1.xpose.msra.mxu0 0.0
    %381 = vmatprep.subr.mxu0 0.0
    %382 = vmatpush1.xpose.msra.mxu0 0.0
    %383 = vmatprep.subr.mxu0 0.0
    %384 = vmatpush1.xpose.msra.mxu0 0.0
    %385 = vmatprep.subr.mxu0 0.0
    %386 = vmatpush1.xpose.msra.mxu0 0.0
    %387 = vmatprep.subr.mxu0 0.0
    %388 = vmatpush1.xpose.msra.mxu0 0.0
    %389 = vmatprep.mubr.f32.mxu0 0.0
    %390 = vmatmul.mubr.f32.gmra.mrb[0].mxu0 %v321
    %v391 = vpop.f32.mrb[0].mxu0
    %v392 = vadd.f32 0.0, %v391
    %v393 = vpop.f32.mrb[0].mxu0
    %394 = vdwg.mxu0
    %395 = vrot.lane.b32.xlu0 %v152, 96
    %v396 = vpop.permute.xlu0 %395
    %v397 = vsel %vm168, %v152, 0
    %v399 = vsel %vm168, %v396, 0
    %401 = vmatprep.subr.mxu0 0.0
    %402 = vmatpush1.xpose.msra.mxu0 %v399
    %403 = vmatprep.subr.mxu0 0.0
    %404 = vmatpush1.xpose.msra.mxu0 0.0
    %405 = vmatprep.subr.mxu0 0.0
    %406 = vmatpush1.xpose.msra.mxu0 0.0
    %407 = vmatprep.subr.mxu0 0.0
    %408 = vmatpush1.xpose.msra.mxu0 0.0
    %409 = vmatprep.subr.mxu0 0.0
    %410 = vmatpush1.xpose.msra.mxu0 0.0
    %411 = vmatprep.subr.mxu0 0.0
    %412 = vmatpush1.xpose.msra.mxu0 0.0
    %413 = vmatprep.subr.mxu0 0.0
    %414 = vmatpush1.xpose.msra.mxu0 0.0
    %415 = vmatprep.subr.mxu0 0.0
    %416 = vmatpush1.xpose.msra.mxu0 0.0
    %417 = vmatprep.subr.mxu0 0.0
    %418 = vmatpush1.xpose.msra.mxu0 0.0
    %419 = vmatprep.subr.mxu0 0.0
    %420 = vmatpush1.xpose.msra.mxu0 0.0
    %421 = vmatprep.subr.mxu0 0.0
    %422 = vmatpush1.xpose.msra.mxu0 0.0
    %423 = vmatprep.subr.mxu0 0.0
    %424 = vmatpush1.xpose.msra.mxu0 0.0
    %425 = vmatprep.subr.mxu0 0.0
    %426 = vmatpush1.xpose.msra.mxu0 0.0
    %427 = vmatprep.subr.mxu0 0.0
    %428 = vmatpush1.xpose.msra.mxu0 0.0
    %429 = vmatprep.subr.mxu0 0.0
    %430 = vmatpush1.xpose.msra.mxu0 0.0
    %431 = vmatprep.subr.mxu0 0.0
    %432 = vmatpush1.xpose.msra.mxu0 0.0
    %433 = vmatprep.subr.mxu0 0.0
    %434 = vmatpush1.xpose.msra.mxu0 0.0
    %435 = vmatprep.subr.mxu0 0.0
    %436 = vmatpush1.xpose.msra.mxu0 0.0
    %437 = vmatprep.subr.mxu0 0.0
    %438 = vmatpush1.xpose.msra.mxu0 0.0
    %439 = vmatprep.subr.mxu0 0.0
    %440 = vmatpush1.xpose.msra.mxu0 0.0
    %441 = vmatprep.subr.mxu0 0.0
    %442 = vmatpush1.xpose.msra.mxu0 0.0
    %443 = vmatprep.subr.mxu0 0.0
    %444 = vmatpush1.xpose.msra.mxu0 0.0
    %445 = vmatprep.subr.mxu0 0.0
    %446 = vmatpush1.xpose.msra.mxu0 0.0
    %447 = vmatprep.subr.mxu0 0.0
    %448 = vmatpush1.xpose.msra.mxu0 0.0
    %449 = vmatprep.subr.mxu0 0.0
    %450 = vmatpush1.xpose.msra.mxu0 0.0
    %451 = vmatprep.subr.mxu0 0.0
    %452 = vmatpush1.xpose.msra.mxu0 0.0
    %453 = vmatprep.subr.mxu0 0.0
    %454 = vmatpush1.xpose.msra.mxu0 0.0
    %455 = vmatprep.subr.mxu0 0.0
    %456 = vmatpush1.xpose.msra.mxu0 0.0
    %457 = vmatprep.subr.mxu0 0.0
    %458 = vmatpush1.xpose.msra.mxu0 0.0
    %459 = vmatprep.subr.mxu0 0.0
    %460 = vmatpush1.xpose.msra.mxu0 0.0
    %461 = vmatprep.subr.mxu0 0.0
    %462 = vmatpush1.xpose.msra.mxu0 0.0
    %463 = vmatprep.subr.mxu0 0.0
    %464 = vmatpush1.xpose.msra.mxu0 0.0
    %465 = vmatprep.mubr.f32.mxu0 0.0
    %466 = vmatmul.mubr.f32.gmra.mrb[0].mxu0 %v397
    %v467 = vpop.f32.mrb[0].mxu0
    %v468 = vadd.f32 0.0, %v467
    %v469 = vpop.f32.mrb[0].mxu0
    %470 = vdwg.mxu0
    %471 = vrot.lane.b32.xlu0 %v154, 96
    %v472 = vpop.permute.xlu0 %471
    %v473 = vsel %vm168, %v154, 0
    %v475 = vsel %vm168, %v472, 0
    %477 = vmatprep.subr.mxu0 0.0
    %478 = vmatpush1.xpose.msra.mxu0 %v475
    %479 = vmatprep.subr.mxu0 0.0
    %480 = vmatpush1.xpose.msra.mxu0 0.0
    %481 = vmatprep.subr.mxu0 0.0
    %482 = vmatpush1.xpose.msra.mxu0 0.0
    %483 = vmatprep.subr.mxu0 0.0
    %484 = vmatpush1.xpose.msra.mxu0 0.0
    %485 = vmatprep.subr.mxu0 0.0
    %486 = vmatpush1.xpose.msra.mxu0 0.0
    %487 = vmatprep.subr.mxu0 0.0
    %488 = vmatpush1.xpose.msra.mxu0 0.0
    %489 = vmatprep.subr.mxu0 0.0
    %490 = vmatpush1.xpose.msra.mxu0 0.0
    %491 = vmatprep.subr.mxu0 0.0
    %492 = vmatpush1.xpose.msra.mxu0 0.0
    %493 = vmatprep.subr.mxu0 0.0
    %494 = vmatpush1.xpose.msra.mxu0 0.0
    %495 = vmatprep.subr.mxu0 0.0
    %496 = vmatpush1.xpose.msra.mxu0 0.0
    %497 = vmatprep.subr.mxu0 0.0
    %498 = vmatpush1.xpose.msra.mxu0 0.0
    %499 = vmatprep.subr.mxu0 0.0
    %500 = vmatpush1.xpose.msra.mxu0 0.0
    %501 = vmatprep.subr.mxu0 0.0
    %502 = vmatpush1.xpose.msra.mxu0 0.0
    %503 = vmatprep.subr.mxu0 0.0
    %504 = vmatpush1.xpose.msra.mxu0 0.0
    %505 = vmatprep.subr.mxu0 0.0
    %506 = vmatpush1.xpose.msra.mxu0 0.0
    %507 = vmatprep.subr.mxu0 0.0
    %508 = vmatpush1.xpose.msra.mxu0 0.0
    %509 = vmatprep.subr.mxu0 0.0
    %510 = vmatpush1.xpose.msra.mxu0 0.0
    %511 = vmatprep.subr.mxu0 0.0
    %512 = vmatpush1.xpose.msra.mxu0 0.0
    %513 = vmatprep.subr.mxu0 0.0
    %514 = vmatpush1.xpose.msra.mxu0 0.0
    %515 = vmatprep.subr.mxu0 0.0
    %516 = vmatpush1.xpose.msra.mxu0 0.0
    %517 = vmatprep.subr.mxu0 0.0
    %518 = vmatpush1.xpose.msra.mxu0 0.0
    %519 = vmatprep.subr.mxu0 0.0
    %520 = vmatpush1.xpose.msra.mxu0 0.0
    %521 = vmatprep.subr.mxu0 0.0
    %522 = vmatpush1.xpose.msra.mxu0 0.0
    %523 = vmatprep.subr.mxu0 0.0
    %524 = vmatpush1.xpose.msra.mxu0 0.0
    %525 = vmatprep.subr.mxu0 0.0
    %526 = vmatpush1.xpose.msra.mxu0 0.0
    %527 = vmatprep.subr.mxu0 0.0
    %528 = vmatpush1.xpose.msra.mxu0 0.0
    %529 = vmatprep.subr.mxu0 0.0
    %530 = vmatpush1.xpose.msra.mxu0 0.0
    %531 = vmatprep.subr.mxu0 0.0
    %532 = vmatpush1.xpose.msra.mxu0 0.0
    %533 = vmatprep.subr.mxu0 0.0
    %534 = vmatpush1.xpose.msra.mxu0 0.0
    %535 = vmatprep.subr.mxu0 0.0
    %536 = vmatpush1.xpose.msra.mxu0 0.0
    %537 = vmatprep.subr.mxu0 0.0
    %538 = vmatpush1.xpose.msra.mxu0 0.0
    %539 = vmatprep.subr.mxu0 0.0
    %540 = vmatpush1.xpose.msra.mxu0 0.0
    %541 = vmatprep.mubr.f32.mxu0 0.0
    %542 = vmatmul.mubr.f32.gmra.mrb[0].mxu0 %v473
    %v543 = vpop.f32.mrb[0].mxu0
    %v544 = vadd.f32 0.0, %v543
    %v545 = vpop.f32.mrb[0].mxu0
    %546 = vdwg.mxu0
    %547 = vrot.lane.b32.xlu0 %v156, 96
    %v548 = vpop.permute.xlu0 %547
    %v549 = vsel %vm168, %v156, 0
    %v551 = vsel %vm168, %v548, 0
    %553 = vmatprep.subr.mxu0 0.0
    %554 = vmatpush1.xpose.msra.mxu0 %v551
    %555 = vmatprep.subr.mxu0 0.0
    %556 = vmatpush1.xpose.msra.mxu0 0.0
    %557 = vmatprep.subr.mxu0 0.0
    %558 = vmatpush1.xpose.msra.mxu0 0.0
    %559 = vmatprep.subr.mxu0 0.0
    %560 = vmatpush1.xpose.msra.mxu0 0.0
    %561 = vmatprep.subr.mxu0 0.0
    %562 = vmatpush1.xpose.msra.mxu0 0.0
    %563 = vmatprep.subr.mxu0 0.0
    %564 = vmatpush1.xpose.msra.mxu0 0.0
    %565 = vmatprep.subr.mxu0 0.0
    %566 = vmatpush1.xpose.msra.mxu0 0.0
    %567 = vmatprep.subr.mxu0 0.0
    %568 = vmatpush1.xpose.msra.mxu0 0.0
    %569 = vmatprep.subr.mxu0 0.0
    %570 = vmatpush1.xpose.msra.mxu0 0.0
    %571 = vmatprep.subr.mxu0 0.0
    %572 = vmatpush1.xpose.msra.mxu0 0.0
    %573 = vmatprep.subr.mxu0 0.0
    %574 = vmatpush1.xpose.msra.mxu0 0.0
    %575 = vmatprep.subr.mxu0 0.0
    %576 = vmatpush1.xpose.msra.mxu0 0.0
    %577 = vmatprep.subr.mxu0 0.0
    %578 = vmatpush1.xpose.msra.mxu0 0.0
    %579 = vmatprep.subr.mxu0 0.0
    %580 = vmatpush1.xpose.msra.mxu0 0.0
    %581 = vmatprep.subr.mxu0 0.0
    %582 = vmatpush1.xpose.msra.mxu0 0.0
    %583 = vmatprep.subr.mxu0 0.0
    %584 = vmatpush1.xpose.msra.mxu0 0.0
    %585 = vmatprep.subr.mxu0 0.0
    %586 = vmatpush1.xpose.msra.mxu0 0.0
    %587 = vmatprep.subr.mxu0 0.0
    %588 = vmatpush1.xpose.msra.mxu0 0.0
    %589 = vmatprep.subr.mxu0 0.0
    %590 = vmatpush1.xpose.msra.mxu0 0.0
    %591 = vmatprep.subr.mxu0 0.0
    %592 = vmatpush1.xpose.msra.mxu0 0.0
    %593 = vmatprep.subr.mxu0 0.0
    %594 = vmatpush1.xpose.msra.mxu0 0.0
    %595 = vmatprep.subr.mxu0 0.0
    %596 = vmatpush1.xpose.msra.mxu0 0.0
    %597 = vmatprep.subr.mxu0 0.0
    %598 = vmatpush1.xpose.msra.mxu0 0.0
    %599 = vmatprep.subr.mxu0 0.0
    %600 = vmatpush1.xpose.msra.mxu0 0.0
    %601 = vmatprep.subr.mxu0 0.0
    %602 = vmatpush1.xpose.msra.mxu0 0.0
    %603 = vmatprep.subr.mxu0 0.0
    %604 = vmatpush1.xpose.msra.mxu0 0.0
    %605 = vmatprep.subr.mxu0 0.0
    %606 = vmatpush1.xpose.msra.mxu0 0.0
    %607 = vmatprep.subr.mxu0 0.0
    %608 = vmatpush1.xpose.msra.mxu0 0.0
    %609 = vmatprep.subr.mxu0 0.0
    %610 = vmatpush1.xpose.msra.mxu0 0.0
    %611 = vmatprep.subr.mxu0 0.0
    %612 = vmatpush1.xpose.msra.mxu0 0.0
    %613 = vmatprep.subr.mxu0 0.0
    %614 = vmatpush1.xpose.msra.mxu0 0.0
    %615 = vmatprep.subr.mxu0 0.0
    %616 = vmatpush1.xpose.msra.mxu0 0.0
    %617 = vmatprep.mubr.f32.mxu0 0.0
    %618 = vmatmul.mubr.f32.gmra.mrb[0].mxu0 %v549
    %v619 = vpop.f32.mrb[0].mxu0
    %v620 = vadd.f32 0.0, %v619
    %v621 = vpop.f32.mrb[0].mxu0
    %622 = vdwg.mxu0
    %623 = vrot.lane.b32.xlu0 %v158, 96
    %v624 = vpop.permute.xlu0 %623
    %v625 = vsel %vm168, %v158, 0
    %v627 = vsel %vm168, %v624, 0
    %629 = vmatprep.subr.mxu0 0.0
    %630 = vmatpush1.xpose.msra.mxu0 %v627
    %631 = vmatprep.subr.mxu0 0.0
    %632 = vmatpush1.xpose.msra.mxu0 0.0
    %633 = vmatprep.subr.mxu0 0.0
    %634 = vmatpush1.xpose.msra.mxu0 0.0
    %635 = vmatprep.subr.mxu0 0.0
    %636 = vmatpush1.xpose.msra.mxu0 0.0
    %637 = vmatprep.subr.mxu0 0.0
    %638 = vmatpush1.xpose.msra.mxu0 0.0
    %639 = vmatprep.subr.mxu0 0.0
    %640 = vmatpush1.xpose.msra.mxu0 0.0
    %641 = vmatprep.subr.mxu0 0.0
    %642 = vmatpush1.xpose.msra.mxu0 0.0
    %643 = vmatprep.subr.mxu0 0.0
    %644 = vmatpush1.xpose.msra.mxu0 0.0
    %645 = vmatprep.subr.mxu0 0.0
    %646 = vmatpush1.xpose.msra.mxu0 0.0
    %647 = vmatprep.subr.mxu0 0.0
    %648 = vmatpush1.xpose.msra.mxu0 0.0
    %649 = vmatprep.subr.mxu0 0.0
    %650 = vmatpush1.xpose.msra.mxu0 0.0
    %651 = vmatprep.subr.mxu0 0.0
    %652 = vmatpush1.xpose.msra.mxu0 0.0
    %653 = vmatprep.subr.mxu0 0.0
    %654 = vmatpush1.xpose.msra.mxu0 0.0
    %655 = vmatprep.subr.mxu0 0.0
    %656 = vmatpush1.xpose.msra.mxu0 0.0
    %657 = vmatprep.subr.mxu0 0.0
    %658 = vmatpush1.xpose.msra.mxu0 0.0
    %659 = vmatprep.subr.mxu0 0.0
    %660 = vmatpush1.xpose.msra.mxu0 0.0
    %661 = vmatprep.subr.mxu0 0.0
    %662 = vmatpush1.xpose.msra.mxu0 0.0
    %663 = vmatprep.subr.mxu0 0.0
    %664 = vmatpush1.xpose.msra.mxu0 0.0
    %665 = vmatprep.subr.mxu0 0.0
    %666 = vmatpush1.xpose.msra.mxu0 0.0
    %667 = vmatprep.subr.mxu0 0.0
    %668 = vmatpush1.xpose.msra.mxu0 0.0
    %669 = vmatprep.subr.mxu0 0.0
    %670 = vmatpush1.xpose.msra.mxu0 0.0
    %671 = vmatprep.subr.mxu0 0.0
    %672 = vmatpush1.xpose.msra.mxu0 0.0
    %673 = vmatprep.subr.mxu0 0.0
    %674 = vmatpush1.xpose.msra.mxu0 0.0
    %675 = vmatprep.subr.mxu0 0.0
    %676 = vmatpush1.xpose.msra.mxu0 0.0
    %677 = vmatprep.subr.mxu0 0.0
    %678 = vmatpush1.xpose.msra.mxu0 0.0
    %679 = vmatprep.subr.mxu0 0.0
    %680 = vmatpush1.xpose.msra.mxu0 0.0
    %681 = vmatprep.subr.mxu0 0.0
    %682 = vmatpush1.xpose.msra.mxu0 0.0
    %683 = vmatprep.subr.mxu0 0.0
    %684 = vmatpush1.xpose.msra.mxu0 0.0
    %685 = vmatprep.subr.mxu0 0.0
    %686 = vmatpush1.xpose.msra.mxu0 0.0
    %687 = vmatprep.subr.mxu0 0.0
    %688 = vmatpush1.xpose.msra.mxu0 0.0
    %689 = vmatprep.subr.mxu0 0.0
    %690 = vmatpush1.xpose.msra.mxu0 0.0
    %691 = vmatprep.subr.mxu0 0.0
    %692 = vmatpush1.xpose.msra.mxu0 0.0
    %693 = vmatprep.mubr.f32.mxu0 0.0
    %694 = vmatmul.mubr.f32.gmra.mrb[0].mxu0 %v625
    %v695 = vpop.f32.mrb[0].mxu0
    %v696 = vadd.f32 0.0, %v695
    %v697 = vpop.f32.mrb[0].mxu0
    %698 = vdwg.mxu0
    %699 = vrot.lane.b32.xlu0 %v160, 96
    %v700 = vpop.permute.xlu0 %699
    %v701 = vsel %vm168, %v160, 0
    %v703 = vsel %vm168, %v700, 0
    %705 = vmatprep.subr.mxu0 0.0
    %706 = vmatpush1.xpose.msra.mxu0 %v703
    %707 = vmatprep.subr.mxu0 0.0
    %708 = vmatpush1.xpose.msra.mxu0 0.0
    %709 = vmatprep.subr.mxu0 0.0
    %710 = vmatpush1.xpose.msra.mxu0 0.0
    %711 = vmatprep.subr.mxu0 0.0
    %712 = vmatpush1.xpose.msra.mxu0 0.0
    %713 = vmatprep.subr.mxu0 0.0
    %714 = vmatpush1.xpose.msra.mxu0 0.0
    %715 = vmatprep.subr.mxu0 0.0
    %716 = vmatpush1.xpose.msra.mxu0 0.0
    %717 = vmatprep.subr.mxu0 0.0
    %718 = vmatpush1.xpose.msra.mxu0 0.0
    %719 = vmatprep.subr.mxu0 0.0
    %720 = vmatpush1.xpose.msra.mxu0 0.0
    %721 = vmatprep.subr.mxu0 0.0
    %722 = vmatpush1.xpose.msra.mxu0 0.0
    %723 = vmatprep.subr.mxu0 0.0
    %724 = vmatpush1.xpose.msra.mxu0 0.0
    %725 = vmatprep.subr.mxu0 0.0
    %726 = vmatpush1.xpose.msra.mxu0 0.0
    %727 = vmatprep.subr.mxu0 0.0
    %728 = vmatpush1.xpose.msra.mxu0 0.0
    %729 = vmatprep.subr.mxu0 0.0
    %730 = vmatpush1.xpose.msra.mxu0 0.0
    %731 = vmatprep.subr.mxu0 0.0
    %732 = vmatpush1.xpose.msra.mxu0 0.0
    %733 = vmatprep.subr.mxu0 0.0
    %734 = vmatpush1.xpose.msra.mxu0 0.0
    %735 = vmatprep.subr.mxu0 0.0
    %736 = vmatpush1.xpose.msra.mxu0 0.0
    %737 = vmatprep.subr.mxu0 0.0
    %738 = vmatpush1.xpose.msra.mxu0 0.0
    %739 = vmatprep.subr.mxu0 0.0
    %740 = vmatpush1.xpose.msra.mxu0 0.0
    %741 = vmatprep.subr.mxu0 0.0
    %742 = vmatpush1.xpose.msra.mxu0 0.0
    %743 = vmatprep.subr.mxu0 0.0
    %744 = vmatpush1.xpose.msra.mxu0 0.0
    %745 = vmatprep.subr.mxu0 0.0
    %746 = vmatpush1.xpose.msra.mxu0 0.0
    %747 = vmatprep.subr.mxu0 0.0
    %748 = vmatpush1.xpose.msra.mxu0 0.0
    %749 = vmatprep.subr.mxu0 0.0
    %750 = vmatpush1.xpose.msra.mxu0 0.0
    %751 = vmatprep.subr.mxu0 0.0
    %752 = vmatpush1.xpose.msra.mxu0 0.0
    %753 = vmatprep.subr.mxu0 0.0
    %754 = vmatpush1.xpose.msra.mxu0 0.0
    %755 = vmatprep.subr.mxu0 0.0
    %756 = vmatpush1.xpose.msra.mxu0 0.0
    %757 = vmatprep.subr.mxu0 0.0
    %758 = vmatpush1.xpose.msra.mxu0 0.0
    %759 = vmatprep.subr.mxu0 0.0
    %760 = vmatpush1.xpose.msra.mxu0 0.0
    %761 = vmatprep.subr.mxu0 0.0
    %762 = vmatpush1.xpose.msra.mxu0 0.0
    %763 = vmatprep.subr.mxu0 0.0
    %764 = vmatpush1.xpose.msra.mxu0 0.0
    %765 = vmatprep.subr.mxu0 0.0
    %766 = vmatpush1.xpose.msra.mxu0 0.0
    %767 = vmatprep.subr.mxu0 0.0
    %768 = vmatpush1.xpose.msra.mxu0 0.0
    %769 = vmatprep.mubr.f32.mxu0 0.0
    %770 = vmatmul.mubr.f32.gmra.mrb[0].mxu0 %v701
    %v771 = vpop.f32.mrb[0].mxu0
    %v772 = vadd.f32 0.0, %v771
    %v773 = vpop.f32.mrb[0].mxu0
    %774 = vdwg.mxu0
    %v775 = vsel %vm165, 1, 0
    %vm776 = vcmp.eq.s32.totalorder %v775, 1
    %v777 = vsel %vm776, %v240, -1e+30
    %v778 = vsel %vm776, %v316, -1e+30
    %v779 = vsel %vm776, %v392, -1e+30
    %v780 = vsel %vm776, %v468, -1e+30
    %v781 = vsel %vm776, %v544, -1e+30
    %v782 = vsel %vm776, %v620, -1e+30
    %v783 = vsel %vm776, %v696, -1e+30
    %v784 = vsel %vm776, %v772, -1e+30
    %v785 = vsel %vm168, %v777, -inf
    %786 = vmax.xlane.f32.xlu0 %v785
    %v787 = vpop.xlane.xlu0 %786
    %v788 = vsel %vm168, %v778, -inf
    %789 = vmax.xlane.f32.xlu0 %v788
    %v790 = vpop.xlane.xlu0 %789
    %v791 = vsel %vm168, %v779, -inf
    %792 = vmax.xlane.f32.xlu0 %v791
    %v793 = vpop.xlane.xlu0 %792
    %v794 = vsel %vm168, %v780, -inf
    %795 = vmax.xlane.f32.xlu0 %v794
    %v796 = vpop.xlane.xlu0 %795
    %v797 = vsel %vm168, %v781, -inf
    %798 = vmax.xlane.f32.xlu0 %v797
    %v799 = vpop.xlane.xlu0 %798
    %v800 = vsel %vm168, %v782, -inf
    %801 = vmax.xlane.f32.xlu0 %v800
    %v802 = vpop.xlane.xlu0 %801
    %v803 = vsel %vm168, %v783, -inf
    %804 = vmax.xlane.f32.xlu0 %v803
    %v805 = vpop.xlane.xlu0 %804
    %v806 = vsel %vm168, %v784, -inf
    %807 = vmax.xlane.f32.xlu0 %v806
    %v808 = vpop.xlane.xlu0 %807
    %v809 = vsub.f32 %v777, %v787
    %v810 = vsub.f32 %v778, %v790
    %v811 = vsub.f32 %v779, %v793
    %v812 = vsub.f32 %v780, %v796
    %v813 = vsub.f32 %v781, %v799
    %v814 = vsub.f32 %v782, %v802
    %v815 = vsub.f32 %v783, %v805
    %v816 = vsub.f32 %v784, %v808
    %v817 = vmul.f32 %v809, 1.442695
    %v818 = vpow.pop %v817
    %v819 = vmul.f32 %v810, 1.442695
    %v820 = vpow.pop %v819
    %v821 = vmul.f32 %v811, 1.442695
    %v822 = vpow.pop %v821
    %v823 = vmul.f32 %v812, 1.442695
    %v824 = vpow.pop %v823
    %v825 = vmul.f32 %v813, 1.442695
    %v826 = vpow.pop %v825
    %v827 = vmul.f32 %v814, 1.442695
    %v828 = vpow.pop %v827
    %v829 = vmul.f32 %v815, 1.442695
    %v830 = vpow.pop %v829
    %v831 = vmul.f32 %v816, 1.442695
    %v832 = vpow.pop %v831
    %v833 = vsel %vm168, %v818, 0.0
    %834 = vadd.xlane.f32.xlu0 %v833
    %v835 = vpop.xlane.xlu0 %834
    %v836 = vsel %vm168, %v820, 0.0
    %837 = vadd.xlane.f32.xlu0 %v836
    %v838 = vpop.xlane.xlu0 %837
    %v839 = vsel %vm168, %v822, 0.0
    %840 = vadd.xlane.f32.xlu0 %v839
    %v841 = vpop.xlane.xlu0 %840
    %v842 = vsel %vm168, %v824, 0.0
    %843 = vadd.xlane.f32.xlu0 %v842
    %v844 = vpop.xlane.xlu0 %843
    %v845 = vsel %vm168, %v826, 0.0
    %846 = vadd.xlane.f32.xlu0 %v845
    %v847 = vpop.xlane.xlu0 %846
    %v848 = vsel %vm168, %v828, 0.0
    %849 = vadd.xlane.f32.xlu0 %v848
    %v850 = vpop.xlane.xlu0 %849
    %v851 = vsel %vm168, %v830, 0.0
    %852 = vadd.xlane.f32.xlu0 %v851
    %v853 = vpop.xlane.xlu0 %852
    %v854 = vsel %vm168, %v832, 0.0
    %855 = vadd.xlane.f32.xlu0 %v854
    %v856 = vpop.xlane.xlu0 %855
    %857 = vrot.lane.b32.xlu0 %v139, 64
    %v858 = vpop.permute.xlu0 %857
    %v861 = vsel %vm168, %v818, 0
    %863 = vmatprep.subr.mxu0 0.0
    %864 = vmatpush1.msra.mxu0 %v858
    %865 = vmatprep.subr.mxu0 0.0
    %866 = vmatpush1.msra.mxu0 0.0
    %867 = vmatprep.subr.mxu0 0.0
    %868 = vmatpush1.msra.mxu0 0.0
    %869 = vmatprep.subr.mxu0 0.0
    %870 = vmatpush1.msra.mxu0 0.0
    %871 = vmatprep.subr.mxu0 0.0
    %872 = vmatpush1.msra.mxu0 0.0
    %873 = vmatprep.subr.mxu0 0.0
    %874 = vmatpush1.msra.mxu0 0.0
    %875 = vmatprep.subr.mxu0 0.0
    %876 = vmatpush1.msra.mxu0 0.0
    %877 = vmatprep.subr.mxu0 0.0
    %878 = vmatpush1.msra.mxu0 0.0
    %879 = vmatprep.subr.mxu0 0.0
    %880 = vmatpush1.msra.mxu0 0.0
    %881 = vmatprep.subr.mxu0 0.0
    %882 = vmatpush1.msra.mxu0 0.0
    %883 = vmatprep.subr.mxu0 0.0
    %884 = vmatpush1.msra.mxu0 0.0
    %885 = vmatprep.subr.mxu0 0.0
    %886 = vmatpush1.msra.mxu0 0.0
    %887 = vmatprep.subr.mxu0 0.0
    %888 = vmatpush1.msra.mxu0 0.0
    %889 = vmatprep.subr.mxu0 0.0
    %890 = vmatpush1.msra.mxu0 0.0
    %891 = vmatprep.subr.mxu0 0.0
    %892 = vmatpush1.msra.mxu0 0.0
    %893 = vmatprep.subr.mxu0 0.0
    %894 = vmatpush1.msra.mxu0 0.0
    %895 = vmatprep.subr.mxu0 0.0
    %896 = vmatpush1.msra.mxu0 0.0
    %897 = vmatprep.subr.mxu0 0.0
    %898 = vmatpush1.msra.mxu0 0.0
    %899 = vmatprep.subr.mxu0 0.0
    %900 = vmatpush1.msra.mxu0 0.0
    %901 = vmatprep.subr.mxu0 0.0
    %902 = vmatpush1.msra.mxu0 0.0
    %903 = vmatprep.subr.mxu0 0.0
    %904 = vmatpush1.msra.mxu0 0.0
    %905 = vmatprep.subr.mxu0 0.0
    %906 = vmatpush1.msra.mxu0 0.0
    %907 = vmatprep.subr.mxu0 0.0
    %908 = vmatpush1.msra.mxu0 0.0
    %909 = vmatprep.subr.mxu0 0.0
    %910 = vmatpush1.msra.mxu0 0.0
    %911 = vmatprep.subr.mxu0 0.0
    %912 = vmatpush1.msra.mxu0 0.0
    %913 = vmatprep.subr.mxu0 0.0
    %914 = vmatpush1.msra.mxu0 0.0
    %915 = vmatprep.subr.mxu0 0.0
    %916 = vmatpush1.msra.mxu0 0.0
    %917 = vmatprep.subr.mxu0 0.0
    %918 = vmatpush1.msra.mxu0 0.0
    %919 = vmatprep.subr.mxu0 0.0
    %920 = vmatpush1.msra.mxu0 0.0
    %921 = vmatprep.subr.mxu0 0.0
    %922 = vmatpush1.msra.mxu0 0.0
    %923 = vmatprep.subr.mxu0 0.0
    %924 = vmatpush1.msra.mxu0 0.0
    %925 = vmatprep.subr.mxu0 0.0
    %926 = vmatpush1.msra.mxu0 0.0
    %927 = vmatprep.mubr.f32.mxu0 0.0
    %928 = vmatmul.mubr.f32.gmra.mrb[0].mxu0 %v861
    %v929 = vpop.f32.mrb[0].mxu0
    %v930 = vadd.f32 0.0, %v929
    %v931 = vpop.f32.mrb[0].mxu0
    %932 = vdwg.mxu0
    %933 = vrot.lane.b32.xlu0 %v144, 64
    %v934 = vpop.permute.xlu0 %933
    %v937 = vsel %vm168, %v820, 0
    %939 = vmatprep.subr.mxu0 0.0
    %940 = vmatpush1.msra.mxu0 %v934
    %941 = vmatprep.subr.mxu0 0.0
    %942 = vmatpush1.msra.mxu0 0.0
    %943 = vmatprep.subr.mxu0 0.0
    %944 = vmatpush1.msra.mxu0 0.0
    %945 = vmatprep.subr.mxu0 0.0
    %946 = vmatpush1.msra.mxu0 0.0
    %947 = vmatprep.subr.mxu0 0.0
    %948 = vmatpush1.msra.mxu0 0.0
    %949 = vmatprep.subr.mxu0 0.0
    %950 = vmatpush1.msra.mxu0 0.0
    %951 = vmatprep.subr.mxu0 0.0
    %952 = vmatpush1.msra.mxu0 0.0
    %953 = vmatprep.subr.mxu0 0.0
    %954 = vmatpush1.msra.mxu0 0.0
    %955 = vmatprep.subr.mxu0 0.0
    %956 = vmatpush1.msra.mxu0 0.0
    %957 = vmatprep.subr.mxu0 0.0
    %958 = vmatpush1.msra.mxu0 0.0
    %959 = vmatprep.subr.mxu0 0.0
    %960 = vmatpush1.msra.mxu0 0.0
    %961 = vmatprep.subr.mxu0 0.0
    %962 = vmatpush1.msra.mxu0 0.0
    %963 = vmatprep.subr.mxu0 0.0
    %964 = vmatpush1.msra.mxu0 0.0
    %965 = vmatprep.subr.mxu0 0.0
    %966 = vmatpush1.msra.mxu0 0.0
    %967 = vmatprep.subr.mxu0 0.0
    %968 = vmatpush1.msra.mxu0 0.0
    %969 = vmatprep.subr.mxu0 0.0
    %970 = vmatpush1.msra.mxu0 0.0
    %971 = vmatprep.subr.mxu0 0.0
    %972 = vmatpush1.msra.mxu0 0.0
    %973 = vmatprep.subr.mxu0 0.0
    %974 = vmatpush1.msra.mxu0 0.0
    %975 = vmatprep.subr.mxu0 0.0
    %976 = vmatpush1.msra.mxu0 0.0
    %977 = vmatprep.subr.mxu0 0.0
    %978 = vmatpush1.msra.mxu0 0.0
    %979 = vmatprep.subr.mxu0 0.0
    %980 = vmatpush1.msra.mxu0 0.0
    %981 = vmatprep.subr.mxu0 0.0
    %982 = vmatpush1.msra.mxu0 0.0
    %983 = vmatprep.subr.mxu0 0.0
    %984 = vmatpush1.msra.mxu0 0.0
    %985 = vmatprep.subr.mxu0 0.0
    %986 = vmatpush1.msra.mxu0 0.0
    %987 = vmatprep.subr.mxu0 0.0
    %988 = vmatpush1.msra.mxu0 0.0
    %989 = vmatprep.subr.mxu0 0.0
    %990 = vmatpush1.msra.mxu0 0.0
    %991 = vmatprep.subr.mxu0 0.0
    %992 = vmatpush1.msra.mxu0 0.0
    %993 = vmatprep.subr.mxu0 0.0
    %994 = vmatpush1.msra.mxu0 0.0
    %995 = vmatprep.subr.mxu0 0.0
    %996 = vmatpush1.msra.mxu0 0.0
    %997 = vmatprep.subr.mxu0 0.0
    %998 = vmatpush1.msra.mxu0 0.0
    %999 = vmatprep.subr.mxu0 0.0
    %1000 = vmatpush1.msra.mxu0 0.0
    %1001 = vmatprep.subr.mxu0 0.0
    %1002 = vmatpush1.msra.mxu0 0.0
    %1003 = vmatprep.mubr.f32.mxu0 0.0
    %1004 = vmatmul.mubr.f32.gmra.mrb[0].mxu0 %v937
    %v1005 = vpop.f32.mrb[0].mxu0
    %v1006 = vadd.f32 0.0, %v1005
    %v1007 = vpop.f32.mrb[0].mxu0
    %1008 = vdwg.mxu0
    %1009 = vrot.lane.b32.xlu0 %v150, 64
    %v1010 = vpop.permute.xlu0 %1009
    %v1013 = vsel %vm168, %v822, 0
    %1015 = vmatprep.subr.mxu0 0.0
    %1016 = vmatpush1.msra.mxu0 %v1010
    %1017 = vmatprep.subr.mxu0 0.0
    %1018 = vmatpush1.msra.mxu0 0.0
    %1019 = vmatprep.subr.mxu0 0.0
    %1020 = vmatpush1.msra.mxu0 0.0
    %1021 = vmatprep.subr.mxu0 0.0
    %1022 = vmatpush1.msra.mxu0 0.0
    %1023 = vmatprep.subr.mxu0 0.0
    %1024 = vmatpush1.msra.mxu0 0.0
    %1025 = vmatprep.subr.mxu0 0.0
    %1026 = vmatpush1.msra.mxu0 0.0
    %1027 = vmatprep.subr.mxu0 0.0
    %1028 = vmatpush1.msra.mxu0 0.0
    %1029 = vmatprep.subr.mxu0 0.0
    %1030 = vmatpush1.msra.mxu0 0.0
    %1031 = vmatprep.subr.mxu0 0.0
    %1032 = vmatpush1.msra.mxu0 0.0
    %1033 = vmatprep.subr.mxu0 0.0
    %1034 = vmatpush1.msra.mxu0 0.0
    %1035 = vmatprep.subr.mxu0 0.0
    %1036 = vmatpush1.msra.mxu0 0.0
    %1037 = vmatprep.subr.mxu0 0.0
    %1038 = vmatpush1.msra.mxu0 0.0
    %1039 = vmatprep.subr.mxu0 0.0
    %1040 = vmatpush1.msra.mxu0 0.0
    %1041 = vmatprep.subr.mxu0 0.0
    %1042 = vmatpush1.msra.mxu0 0.0
    %1043 = vmatprep.subr.mxu0 0.0
    %1044 = vmatpush1.msra.mxu0 0.0
    %1045 = vmatprep.subr.mxu0 0.0
    %1046 = vmatpush1.msra.mxu0 0.0
    %1047 = vmatprep.subr.mxu0 0.0
    %1048 = vmatpush1.msra.mxu0 0.0
    %1049 = vmatprep.subr.mxu0 0.0
    %1050 = vmatpush1.msra.mxu0 0.0
    %1051 = vmatprep.subr.mxu0 0.0
    %1052 = vmatpush1.msra.mxu0 0.0
    %1053 = vmatprep.subr.mxu0 0.0
    %1054 = vmatpush1.msra.mxu0 0.0
    %1055 = vmatprep.subr.mxu0 0.0
    %1056 = vmatpush1.msra.mxu0 0.0
    %1057 = vmatprep.subr.mxu0 0.0
    %1058 = vmatpush1.msra.mxu0 0.0
    %1059 = vmatprep.subr.mxu0 0.0
    %1060 = vmatpush1.msra.mxu0 0.0
    %1061 = vmatprep.subr.mxu0 0.0
    %1062 = vmatpush1.msra.mxu0 0.0
    %1063 = vmatprep.subr.mxu0 0.0
    %1064 = vmatpush1.msra.mxu0 0.0
    %1065 = vmatprep.subr.mxu0 0.0
    %1066 = vmatpush1.msra.mxu0 0.0
    %1067 = vmatprep.subr.mxu0 0.0
    %1068 = vmatpush1.msra.mxu0 0.0
    %1069 = vmatprep.subr.mxu0 0.0
    %1070 = vmatpush1.msra.mxu0 0.0
    %1071 = vmatprep.subr.mxu0 0.0
    %1072 = vmatpush1.msra.mxu0 0.0
    %1073 = vmatprep.subr.mxu0 0.0
    %1074 = vmatpush1.msra.mxu0 0.0
    %1075 = vmatprep.subr.mxu0 0.0
    %1076 = vmatpush1.msra.mxu0 0.0
    %1077 = vmatprep.subr.mxu0 0.0
    %1078 = vmatpush1.msra.mxu0 0.0
    %1079 = vmatprep.mubr.f32.mxu0 0.0
    %1080 = vmatmul.mubr.f32.gmra.mrb[0].mxu0 %v1013
    %v1081 = vpop.f32.mrb[0].mxu0
    %v1082 = vadd.f32 0.0, %v1081
    %v1083 = vpop.f32.mrb[0].mxu0
    %1084 = vdwg.mxu0
    %1085 = vrot.lane.b32.xlu0 %v152, 64
    %v1086 = vpop.permute.xlu0 %1085
    %v1089 = vsel %vm168, %v824, 0
    %1091 = vmatprep.subr.mxu0 0.0
    %1092 = vmatpush1.msra.mxu0 %v1086
    %1093 = vmatprep.subr.mxu0 0.0
    %1094 = vmatpush1.msra.mxu0 0.0
    %1095 = vmatprep.subr.mxu0 0.0
    %1096 = vmatpush1.msra.mxu0 0.0
    %1097 = vmatprep.subr.mxu0 0.0
    %1098 = vmatpush1.msra.mxu0 0.0
    %1099 = vmatprep.subr.mxu0 0.0
    %1100 = vmatpush1.msra.mxu0 0.0
    %1101 = vmatprep.subr.mxu0 0.0
    %1102 = vmatpush1.msra.mxu0 0.0
    %1103 = vmatprep.subr.mxu0 0.0
    %1104 = vmatpush1.msra.mxu0 0.0
    %1105 = vmatprep.subr.mxu0 0.0
    %1106 = vmatpush1.msra.mxu0 0.0
    %1107 = vmatprep.subr.mxu0 0.0
    %1108 = vmatpush1.msra.mxu0 0.0
    %1109 = vmatprep.subr.mxu0 0.0
    %1110 = vmatpush1.msra.mxu0 0.0
    %1111 = vmatprep.subr.mxu0 0.0
    %1112 = vmatpush1.msra.mxu0 0.0
    %1113 = vmatprep.subr.mxu0 0.0
    %1114 = vmatpush1.msra.mxu0 0.0
    %1115 = vmatprep.subr.mxu0 0.0
    %1116 = vmatpush1.msra.mxu0 0.0
    %1117 = vmatprep.subr.mxu0 0.0
    %1118 = vmatpush1.msra.mxu0 0.0
    %1119 = vmatprep.subr.mxu0 0.0
    %1120 = vmatpush1.msra.mxu0 0.0
    %1121 = vmatprep.subr.mxu0 0.0
    %1122 = vmatpush1.msra.mxu0 0.0
    %1123 = vmatprep.subr.mxu0 0.0
    %1124 = vmatpush1.msra.mxu0 0.0
    %1125 = vmatprep.subr.mxu0 0.0
    %1126 = vmatpush1.msra.mxu0 0.0
    %1127 = vmatprep.subr.mxu0 0.0
    %1128 = vmatpush1.msra.mxu0 0.0
    %1129 = vmatprep.subr.mxu0 0.0
    %1130 = vmatpush1.msra.mxu0 0.0
    %1131 = vmatprep.subr.mxu0 0.0
    %1132 = vmatpush1.msra.mxu0 0.0
    %1133 = vmatprep.subr.mxu0 0.0
    %1134 = vmatpush1.msra.mxu0 0.0
    %1135 = vmatprep.subr.mxu0 0.0
    %1136 = vmatpush1.msra.mxu0 0.0
    %1137 = vmatprep.subr.mxu0 0.0
    %1138 = vmatpush1.msra.mxu0 0.0
    %1139 = vmatprep.subr.mxu0 0.0
    %1140 = vmatpush1.msra.mxu0 0.0
    %1141 = vmatprep.subr.mxu0 0.0
    %1142 = vmatpush1.msra.mxu0 0.0
    %1143 = vmatprep.subr.mxu0 0.0
    %1144 = vmatpush1.msra.mxu0 0.0
    %1145 = vmatprep.subr.mxu0 0.0
    %1146 = vmatpush1.msra.mxu0 0.0
    %1147 = vmatprep.subr.mxu0 0.0
    %1148 = vmatpush1.msra.mxu0 0.0
    %1149 = vmatprep.subr.mxu0 0.0
    %1150 = vmatpush1.msra.mxu0 0.0
    %1151 = vmatprep.subr.mxu0 0.0
    %1152 = vmatpush1.msra.mxu0 0.0
    %1153 = vmatprep.subr.mxu0 0.0
    %1154 = vmatpush1.msra.mxu0 0.0
    %1155 = vmatprep.mubr.f32.mxu0 0.0
    %1156 = vmatmul.mubr.f32.gmra.mrb[0].mxu0 %v1089
    %v1157 = vpop.f32.mrb[0].mxu0
    %v1158 = vadd.f32 0.0, %v1157
    %v1159 = vpop.f32.mrb[0].mxu0
    %1160 = vdwg.mxu0
    %1161 = vrot.lane.b32.xlu0 %v154, 64
    %v1162 = vpop.permute.xlu0 %1161
    %v1165 = vsel %vm168, %v826, 0
    %1167 = vmatprep.subr.mxu0 0.0
    %1168 = vmatpush1.msra.mxu0 %v1162
    %1169 = vmatprep.subr.mxu0 0.0
    %1170 = vmatpush1.msra.mxu0 0.0
    %1171 = vmatprep.subr.mxu0 0.0
    %1172 = vmatpush1.msra.mxu0 0.0
    %1173 = vmatprep.subr.mxu0 0.0
    %1174 = vmatpush1.msra.mxu0 0.0
    %1175 = vmatprep.subr.mxu0 0.0
    %1176 = vmatpush1.msra.mxu0 0.0
    %1177 = vmatprep.subr.mxu0 0.0
    %1178 = vmatpush1.msra.mxu0 0.0
    %1179 = vmatprep.subr.mxu0 0.0
    %1180 = vmatpush1.msra.mxu0 0.0
    %1181 = vmatprep.subr.mxu0 0.0
    %1182 = vmatpush1.msra.mxu0 0.0
    %1183 = vmatprep.subr.mxu0 0.0
    %1184 = vmatpush1.msra.mxu0 0.0
    %1185 = vmatprep.subr.mxu0 0.0
    %1186 = vmatpush1.msra.mxu0 0.0
    %1187 = vmatprep.subr.mxu0 0.0
    %1188 = vmatpush1.msra.mxu0 0.0
    %1189 = vmatprep.subr.mxu0 0.0
    %1190 = vmatpush1.msra.mxu0 0.0
    %1191 = vmatprep.subr.mxu0 0.0
    %1192 = vmatpush1.msra.mxu0 0.0
    %1193 = vmatprep.subr.mxu0 0.0
    %1194 = vmatpush1.msra.mxu0 0.0
    %1195 = vmatprep.subr.mxu0 0.0
    %1196 = vmatpush1.msra.mxu0 0.0
    %1197 = vmatprep.subr.mxu0 0.0
    %1198 = vmatpush1.msra.mxu0 0.0
    %1199 = vmatprep.subr.mxu0 0.0
    %1200 = vmatpush1.msra.mxu0 0.0
    %1201 = vmatprep.subr.mxu0 0.0
    %1202 = vmatpush1.msra.mxu0 0.0
    %1203 = vmatprep.subr.mxu0 0.0
    %1204 = vmatpush1.msra.mxu0 0.0
    %1205 = vmatprep.subr.mxu0 0.0
    %1206 = vmatpush1.msra.mxu0 0.0
    %1207 = vmatprep.subr.mxu0 0.0
    %1208 = vmatpush1.msra.mxu0 0.0
    %1209 = vmatprep.subr.mxu0 0.0
    %1210 = vmatpush1.msra.mxu0 0.0
    %1211 = vmatprep.subr.mxu0 0.0
    %1212 = vmatpush1.msra.mxu0 0.0
    %1213 = vmatprep.subr.mxu0 0.0
    %1214 = vmatpush1.msra.mxu0 0.0
    %1215 = vmatprep.subr.mxu0 0.0
    %1216 = vmatpush1.msra.mxu0 0.0
    %1217 = vmatprep.subr.mxu0 0.0
    %1218 = vmatpush1.msra.mxu0 0.0
    %1219 = vmatprep.subr.mxu0 0.0
    %1220 = vmatpush1.msra.mxu0 0.0
    %1221 = vmatprep.subr.mxu0 0.0
    %1222 = vmatpush1.msra.mxu0 0.0
    %1223 = vmatprep.subr.mxu0 0.0
    %1224 = vmatpush1.msra.mxu0 0.0
    %1225 = vmatprep.subr.mxu0 0.0
    %1226 = vmatpush1.msra.mxu0 0.0
    %1227 = vmatprep.subr.mxu0 0.0
    %1228 = vmatpush1.msra.mxu0 0.0
    %1229 = vmatprep.subr.mxu0 0.0
    %1230 = vmatpush1.msra.mxu0 0.0
    %1231 = vmatprep.mubr.f32.mxu0 0.0
    %1232 = vmatmul.mubr.f32.gmra.mrb[0].mxu0 %v1165
    %v1233 = vpop.f32.mrb[0].mxu0
    %v1234 = vadd.f32 0.0, %v1233
    %v1235 = vpop.f32.mrb[0].mxu0
    %1236 = vdwg.mxu0
    %1237 = vrot.lane.b32.xlu0 %v156, 64
    %v1238 = vpop.permute.xlu0 %1237
    %v1241 = vsel %vm168, %v828, 0
    %1243 = vmatprep.subr.mxu0 0.0
    %1244 = vmatpush1.msra.mxu0 %v1238
    %1245 = vmatprep.subr.mxu0 0.0
    %1246 = vmatpush1.msra.mxu0 0.0
    %1247 = vmatprep.subr.mxu0 0.0
    %1248 = vmatpush1.msra.mxu0 0.0
    %1249 = vmatprep.subr.mxu0 0.0
    %1250 = vmatpush1.msra.mxu0 0.0
    %1251 = vmatprep.subr.mxu0 0.0
    %1252 = vmatpush1.msra.mxu0 0.0
    %1253 = vmatprep.subr.mxu0 0.0
    %1254 = vmatpush1.msra.mxu0 0.0
    %1255 = vmatprep.subr.mxu0 0.0
    %1256 = vmatpush1.msra.mxu0 0.0
    %1257 = vmatprep.subr.mxu0 0.0
    %1258 = vmatpush1.msra.mxu0 0.0
    %1259 = vmatprep.subr.mxu0 0.0
    %1260 = vmatpush1.msra.mxu0 0.0
    %1261 = vmatprep.subr.mxu0 0.0
    %1262 = vmatpush1.msra.mxu0 0.0
    %1263 = vmatprep.subr.mxu0 0.0
    %1264 = vmatpush1.msra.mxu0 0.0
    %1265 = vmatprep.subr.mxu0 0.0
    %1266 = vmatpush1.msra.mxu0 0.0
    %1267 = vmatprep.subr.mxu0 0.0
    %1268 = vmatpush1.msra.mxu0 0.0
    %1269 = vmatprep.subr.mxu0 0.0
    %1270 = vmatpush1.msra.mxu0 0.0
    %1271 = vmatprep.subr.mxu0 0.0
    %1272 = vmatpush1.msra.mxu0 0.0
    %1273 = vmatprep.subr.mxu0 0.0
    %1274 = vmatpush1.msra.mxu0 0.0
    %1275 = vmatprep.subr.mxu0 0.0
    %1276 = vmatpush1.msra.mxu0 0.0
    %1277 = vmatprep.subr.mxu0 0.0
    %1278 = vmatpush1.msra.mxu0 0.0
    %1279 = vmatprep.subr.mxu0 0.0
    %1280 = vmatpush1.msra.mxu0 0.0
    %1281 = vmatprep.subr.mxu0 0.0
    %1282 = vmatpush1.msra.mxu0 0.0
    %1283 = vmatprep.subr.mxu0 0.0
    %1284 = vmatpush1.msra.mxu0 0.0
    %1285 = vmatprep.subr.mxu0 0.0
    %1286 = vmatpush1.msra.mxu0 0.0
    %1287 = vmatprep.subr.mxu0 0.0
    %1288 = vmatpush1.msra.mxu0 0.0
    %1289 = vmatprep.subr.mxu0 0.0
    %1290 = vmatpush1.msra.mxu0 0.0
    %1291 = vmatprep.subr.mxu0 0.0
    %1292 = vmatpush1.msra.mxu0 0.0
    %1293 = vmatprep.subr.mxu0 0.0
    %1294 = vmatpush1.msra.mxu0 0.0
    %1295 = vmatprep.subr.mxu0 0.0
    %1296 = vmatpush1.msra.mxu0 0.0
    %1297 = vmatprep.subr.mxu0 0.0
    %1298 = vmatpush1.msra.mxu0 0.0
    %1299 = vmatprep.subr.mxu0 0.0
    %1300 = vmatpush1.msra.mxu0 0.0
    %1301 = vmatprep.subr.mxu0 0.0
    %1302 = vmatpush1.msra.mxu0 0.0
    %1303 = vmatprep.subr.mxu0 0.0
    %1304 = vmatpush1.msra.mxu0 0.0
    %1305 = vmatprep.subr.mxu0 0.0
    %1306 = vmatpush1.msra.mxu0 0.0
    %1307 = vmatprep.mubr.f32.mxu0 0.0
    %1308 = vmatmul.mubr.f32.gmra.mrb[0].mxu0 %v1241
    %v1309 = vpop.f32.mrb[0].mxu0
    %v1310 = vadd.f32 0.0, %v1309
    %v1311 = vpop.f32.mrb[0].mxu0
    %1312 = vdwg.mxu0
    %1313 = vrot.lane.b32.xlu0 %v158, 64
    %v1314 = vpop.permute.xlu0 %1313
    %v1317 = vsel %vm168, %v830, 0
    %1319 = vmatprep.subr.mxu0 0.0
    %1320 = vmatpush1.msra.mxu0 %v1314
    %1321 = vmatprep.subr.mxu0 0.0
    %1322 = vmatpush1.msra.mxu0 0.0
    %1323 = vmatprep.subr.mxu0 0.0
    %1324 = vmatpush1.msra.mxu0 0.0
    %1325 = vmatprep.subr.mxu0 0.0
    %1326 = vmatpush1.msra.mxu0 0.0
    %1327 = vmatprep.subr.mxu0 0.0
    %1328 = vmatpush1.msra.mxu0 0.0
    %1329 = vmatprep.subr.mxu0 0.0
    %1330 = vmatpush1.msra.mxu0 0.0
    %1331 = vmatprep.subr.mxu0 0.0
    %1332 = vmatpush1.msra.mxu0 0.0
    %1333 = vmatprep.subr.mxu0 0.0
    %1334 = vmatpush1.msra.mxu0 0.0
    %1335 = vmatprep.subr.mxu0 0.0
    %1336 = vmatpush1.msra.mxu0 0.0
    %1337 = vmatprep.subr.mxu0 0.0
    %1338 = vmatpush1.msra.mxu0 0.0
    %1339 = vmatprep.subr.mxu0 0.0
    %1340 = vmatpush1.msra.mxu0 0.0
    %1341 = vmatprep.subr.mxu0 0.0
    %1342 = vmatpush1.msra.mxu0 0.0
    %1343 = vmatprep.subr.mxu0 0.0
    %1344 = vmatpush1.msra.mxu0 0.0
    %1345 = vmatprep.subr.mxu0 0.0
    %1346 = vmatpush1.msra.mxu0 0.0
    %1347 = vmatprep.subr.mxu0 0.0
    %1348 = vmatpush1.msra.mxu0 0.0
    %1349 = vmatprep.subr.mxu0 0.0
    %1350 = vmatpush1.msra.mxu0 0.0
    %1351 = vmatprep.subr.mxu0 0.0
    %1352 = vmatpush1.msra.mxu0 0.0
    %1353 = vmatprep.subr.mxu0 0.0
    %1354 = vmatpush1.msra.mxu0 0.0
    %1355 = vmatprep.subr.mxu0 0.0
    %1356 = vmatpush1.msra.mxu0 0.0
    %1357 = vmatprep.subr.mxu0 0.0
    %1358 = vmatpush1.msra.mxu0 0.0
    %1359 = vmatprep.subr.mxu0 0.0
    %1360 = vmatpush1.msra.mxu0 0.0
    %1361 = vmatprep.subr.mxu0 0.0
    %1362 = vmatpush1.msra.mxu0 0.0
    %1363 = vmatprep.subr.mxu0 0.0
    %1364 = vmatpush1.msra.mxu0 0.0
    %1365 = vmatprep.subr.mxu0 0.0
    %1366 = vmatpush1.msra.mxu0 0.0
    %1367 = vmatprep.subr.mxu0 0.0
    %1368 = vmatpush1.msra.mxu0 0.0
    %1369 = vmatprep.subr.mxu0 0.0
    %1370 = vmatpush1.msra.mxu0 0.0
    %1371 = vmatprep.subr.mxu0 0.0
    %1372 = vmatpush1.msra.mxu0 0.0
    %1373 = vmatprep.subr.mxu0 0.0
    %1374 = vmatpush1.msra.mxu0 0.0
    %1375 = vmatprep.subr.mxu0 0.0
    %1376 = vmatpush1.msra.mxu0 0.0
    %1377 = vmatprep.subr.mxu0 0.0
    %1378 = vmatpush1.msra.mxu0 0.0
    %1379 = vmatprep.subr.mxu0 0.0
    %1380 = vmatpush1.msra.mxu0 0.0
    %1381 = vmatprep.subr.mxu0 0.0
    %1382 = vmatpush1.msra.mxu0 0.0
    %1383 = vmatprep.mubr.f32.mxu0 0.0
    %1384 = vmatmul.mubr.f32.gmra.mrb[0].mxu0 %v1317
    %v1385 = vpop.f32.mrb[0].mxu0
    %v1386 = vadd.f32 0.0, %v1385
    %v1387 = vpop.f32.mrb[0].mxu0
    %1388 = vdwg.mxu0
    %1389 = vrot.lane.b32.xlu0 %v160, 64
    %v1390 = vpop.permute.xlu0 %1389
    %v1393 = vsel %vm168, %v832, 0
    %1395 = vmatprep.subr.mxu0 0.0
    %1396 = vmatpush1.msra.mxu0 %v1390
    %1397 = vmatprep.subr.mxu0 0.0
    %1398 = vmatpush1.msra.mxu0 0.0
    %1399 = vmatprep.subr.mxu0 0.0
    %1400 = vmatpush1.msra.mxu0 0.0
    %1401 = vmatprep.subr.mxu0 0.0
    %1402 = vmatpush1.msra.mxu0 0.0
    %1403 = vmatprep.subr.mxu0 0.0
    %1404 = vmatpush1.msra.mxu0 0.0
    %1405 = vmatprep.subr.mxu0 0.0
    %1406 = vmatpush1.msra.mxu0 0.0
    %1407 = vmatprep.subr.mxu0 0.0
    %1408 = vmatpush1.msra.mxu0 0.0
    %1409 = vmatprep.subr.mxu0 0.0
    %1410 = vmatpush1.msra.mxu0 0.0
    %1411 = vmatprep.subr.mxu0 0.0
    %1412 = vmatpush1.msra.mxu0 0.0
    %1413 = vmatprep.subr.mxu0 0.0
    %1414 = vmatpush1.msra.mxu0 0.0
    %1415 = vmatprep.subr.mxu0 0.0
    %1416 = vmatpush1.msra.mxu0 0.0
    %1417 = vmatprep.subr.mxu0 0.0
    %1418 = vmatpush1.msra.mxu0 0.0
    %1419 = vmatprep.subr.mxu0 0.0
    %1420 = vmatpush1.msra.mxu0 0.0
    %1421 = vmatprep.subr.mxu0 0.0
    %1422 = vmatpush1.msra.mxu0 0.0
    %1423 = vmatprep.subr.mxu0 0.0
    %1424 = vmatpush1.msra.mxu0 0.0
    %1425 = vmatprep.subr.mxu0 0.0
    %1426 = vmatpush1.msra.mxu0 0.0
    %1427 = vmatprep.subr.mxu0 0.0
    %1428 = vmatpush1.msra.mxu0 0.0
    %1429 = vmatprep.subr.mxu0 0.0
    %1430 = vmatpush1.msra.mxu0 0.0
    %1431 = vmatprep.subr.mxu0 0.0
    %1432 = vmatpush1.msra.mxu0 0.0
    %1433 = vmatprep.subr.mxu0 0.0
    %1434 = vmatpush1.msra.mxu0 0.0
    %1435 = vmatprep.subr.mxu0 0.0
    %1436 = vmatpush1.msra.mxu0 0.0
    %1437 = vmatprep.subr.mxu0 0.0
    %1438 = vmatpush1.msra.mxu0 0.0
    %1439 = vmatprep.subr.mxu0 0.0
    %1440 = vmatpush1.msra.mxu0 0.0
    %1441 = vmatprep.subr.mxu0 0.0
    %1442 = vmatpush1.msra.mxu0 0.0
    %1443 = vmatprep.subr.mxu0 0.0
    %1444 = vmatpush1.msra.mxu0 0.0
    %1445 = vmatprep.subr.mxu0 0.0
    %1446 = vmatpush1.msra.mxu0 0.0
    %1447 = vmatprep.subr.mxu0 0.0
    %1448 = vmatpush1.msra.mxu0 0.0
    %1449 = vmatprep.subr.mxu0 0.0
    %1450 = vmatpush1.msra.mxu0 0.0
    %1451 = vmatprep.subr.mxu0 0.0
    %1452 = vmatpush1.msra.mxu0 0.0
    %1453 = vmatprep.subr.mxu0 0.0
    %1454 = vmatpush1.msra.mxu0 0.0
    %1455 = vmatprep.subr.mxu0 0.0
    %1456 = vmatpush1.msra.mxu0 0.0
    %1457 = vmatprep.subr.mxu0 0.0
    %1458 = vmatpush1.msra.mxu0 0.0
    %1459 = vmatprep.mubr.f32.mxu0 0.0
    %1460 = vmatmul.mubr.f32.gmra.mrb[0].mxu0 %v1393
    %v1461 = vpop.f32.mrb[0].mxu0
    %v1462 = vadd.f32 0.0, %v1461
    %v1463 = vpop.f32.mrb[0].mxu0
    %1464 = vdwg.mxu0
    %v1465 = vrcp.pop %v835
    %v1466 = vmul.f32 1.0, %v1465
    %v1467 = vrcp.pop %v838
    %v1468 = vmul.f32 1.0, %v1467
    %v1469 = vrcp.pop %v841
    %v1470 = vmul.f32 1.0, %v1469
    %v1471 = vrcp.pop %v844
    %v1472 = vmul.f32 1.0, %v1471
    %v1473 = vrcp.pop %v847
    %v1474 = vmul.f32 1.0, %v1473
    %v1475 = vrcp.pop %v850
    %v1476 = vmul.f32 1.0, %v1475
    %v1477 = vrcp.pop %v853
    %v1478 = vmul.f32 1.0, %v1477
    %v1479 = vrcp.pop %v856
    %v1480 = vmul.f32 1.0, %v1479
    %v1481 = vmul.f32 %v930, %v1466
    %v1482 = vmul.f32 %v1006, %v1468
    %v1483 = vmul.f32 %v1082, %v1470
    %v1484 = vmul.f32 %v1158, %v1472
    %v1485 = vmul.f32 %v1234, %v1474
    %v1486 = vmul.f32 %v1310, %v1476
    %v1487 = vmul.f32 %v1386, %v1478
    %v1488 = vmul.f32 %v1462, %v1480
    %v1489 = vld [vmem:[#allocation7] sm:$0xff]
    %s1490 = scalar_lea.vmem [#allocation7], 8
    %v1491 = vld [vmem:[%s1490] sm:$0xff]
    %v1493 = vsel %vm168, %v1483, 0
    %v1496 = vsel %vm168, %v1484, 0
    %1498 = vmatprep.subr.mxu0 0.0
    %1499 = vmatpush1.msra.mxu0 %v1491
    %1500 = vmatprep.subr.mxu0 0.0
    %1501 = vmatpush1.msra.mxu0 0.0
    %1502 = vmatprep.subr.mxu0 0.0
    %1503 = vmatpush1.msra.mxu0 0.0
    %1504 = vmatprep.subr.mxu0 0.0
    %1505 = vmatpush1.msra.mxu0 0.0
    %1506 = vmatprep.subr.mxu0 0.0
    %1507 = vmatpush1.msra.mxu0 0.0
    %1508 = vmatprep.subr.mxu0 0.0
    %1509 = vmatpush1.msra.mxu0 0.0
    %1510 = vmatprep.subr.mxu0 0.0
    %1511 = vmatpush1.msra.mxu0 0.0
    %1512 = vmatprep.subr.mxu0 0.0
    %1513 = vmatpush1.msra.mxu0 0.0
    %1514 = vmatprep.subr.mxu0 0.0
    %1515 = vmatpush1.msra.mxu0 0.0
    %1516 = vmatprep.subr.mxu0 0.0
    %1517 = vmatpush1.msra.mxu0 0.0
    %1518 = vmatprep.subr.mxu0 0.0
    %1519 = vmatpush1.msra.mxu0 0.0
    %1520 = vmatprep.subr.mxu0 0.0
    %1521 = vmatpush1.msra.mxu0 0.0
    %1522 = vmatprep.subr.mxu0 0.0
    %1523 = vmatpush1.msra.mxu0 0.0
    %1524 = vmatprep.subr.mxu0 0.0
    %1525 = vmatpush1.msra.mxu0 0.0
    %1526 = vmatprep.subr.mxu0 0.0
    %1527 = vmatpush1.msra.mxu0 0.0
    %1528 = vmatprep.subr.mxu0 0.0
    %1529 = vmatpush1.msra.mxu0 0.0
    %1530 = vmatprep.subr.mxu0 0.0
    %1531 = vmatpush1.msra.mxu0 0.0
    %1532 = vmatprep.subr.mxu0 0.0
    %1533 = vmatpush1.msra.mxu0 0.0
    %1534 = vmatprep.subr.mxu0 0.0
    %1535 = vmatpush1.msra.mxu0 0.0
    %1536 = vmatprep.subr.mxu0 0.0
    %1537 = vmatpush1.msra.mxu0 0.0
    %1538 = vmatprep.subr.mxu0 0.0
    %1539 = vmatpush1.msra.mxu0 0.0
    %1540 = vmatprep.subr.mxu0 0.0
    %1541 = vmatpush1.msra.mxu0 0.0
    %1542 = vmatprep.subr.mxu0 0.0
    %1543 = vmatpush1.msra.mxu0 0.0
    %1544 = vmatprep.subr.mxu0 0.0
    %1545 = vmatpush1.msra.mxu0 0.0
    %1546 = vmatprep.subr.mxu0 0.0
    %1547 = vmatpush1.msra.mxu0 0.0
    %1548 = vmatprep.subr.mxu0 0.0
    %1549 = vmatpush1.msra.mxu0 0.0
    %1550 = vmatprep.subr.mxu0 0.0
    %1551 = vmatpush1.msra.mxu0 0.0
    %1552 = vmatprep.subr.mxu0 0.0
    %1553 = vmatpush1.msra.mxu0 0.0
    %1554 = vmatprep.subr.mxu0 0.0
    %1555 = vmatpush1.msra.mxu0 0.0
    %1556 = vmatprep.subr.mxu0 0.0
    %1557 = vmatpush1.msra.mxu0 0.0
    %1558 = vmatprep.subr.mxu0 0.0
    %1559 = vmatpush1.msra.mxu0 0.0
    %1560 = vmatprep.subr.mxu0 0.0
    %1561 = vmatpush1.msra.mxu0 0.0
    %1562 = vmatprep.mubr.f32.mxu0 0.0
    %1563 = vmatmul.mubr.f32.gmra.mrb[0].mxu0 %v1493
    %v1564 = vpop.f32.mrb[0].mxu0
    %v1565 = vadd.f32 0.0, %v1564
    %v1566 = vpop.f32.mrb[0].mxu0
    %1567 = vmatprep.mubr.f32.mxu0 0.0
    %1568 = vmatmul.mubr.f32.gmra.mrb[0].mxu0 %v1496
    %v1569 = vpop.f32.mrb[0].mxu0
    %v1570 = vadd.f32 0.0, %v1569
    %v1571 = vpop.f32.mrb[0].mxu0
    %1572 = vdwg.mxu0
    %v1574 = vsel %vm168, %v1481, 0
    %v1577 = vsel %vm168, %v1482, 0
    %1579 = vmatprep.subr.mxu0 0.0
    %1580 = vmatpush1.msra.mxu0 %v1489
    %1581 = vmatprep.subr.mxu0 0.0
    %1582 = vmatpush1.msra.mxu0 0.0
    %1583 = vmatprep.subr.mxu0 0.0
    %1584 = vmatpush1.msra.mxu0 0.0
    %1585 = vmatprep.subr.mxu0 0.0
    %1586 = vmatpush1.msra.mxu0 0.0
    %1587 = vmatprep.subr.mxu0 0.0
    %1588 = vmatpush1.msra.mxu0 0.0
    %1589 = vmatprep.subr.mxu0 0.0
    %1590 = vmatpush1.msra.mxu0 0.0
    %1591 = vmatprep.subr.mxu0 0.0
    %1592 = vmatpush1.msra.mxu0 0.0
    %1593 = vmatprep.subr.mxu0 0.0
    %1594 = vmatpush1.msra.mxu0 0.0
    %1595 = vmatprep.subr.mxu0 0.0
    %1596 = vmatpush1.msra.mxu0 0.0
    %1597 = vmatprep.subr.mxu0 0.0
    %1598 = vmatpush1.msra.mxu0 0.0
    %1599 = vmatprep.subr.mxu0 0.0
    %1600 = vmatpush1.msra.mxu0 0.0
    %1601 = vmatprep.subr.mxu0 0.0
    %1602 = vmatpush1.msra.mxu0 0.0
    %1603 = vmatprep.subr.mxu0 0.0
    %1604 = vmatpush1.msra.mxu0 0.0
    %1605 = vmatprep.subr.mxu0 0.0
    %1606 = vmatpush1.msra.mxu0 0.0
    %1607 = vmatprep.subr.mxu0 0.0
    %1608 = vmatpush1.msra.mxu0 0.0
    %1609 = vmatprep.subr.mxu0 0.0
    %1610 = vmatpush1.msra.mxu0 0.0
    %1611 = vmatprep.subr.mxu0 0.0
    %1612 = vmatpush1.msra.mxu0 0.0
    %1613 = vmatprep.subr.mxu0 0.0
    %1614 = vmatpush1.msra.mxu0 0.0
    %1615 = vmatprep.subr.mxu0 0.0
    %1616 = vmatpush1.msra.mxu0 0.0
    %1617 = vmatprep.subr.mxu0 0.0
    %1618 = vmatpush1.msra.mxu0 0.0
    %1619 = vmatprep.subr.mxu0 0.0
    %1620 = vmatpush1.msra.mxu0 0.0
    %1621 = vmatprep.subr.mxu0 0.0
    %1622 = vmatpush1.msra.mxu0 0.0
    %1623 = vmatprep.subr.mxu0 0.0
    %1624 = vmatpush1.msra.mxu0 0.0
    %1625 = vmatprep.subr.mxu0 0.0
    %1626 = vmatpush1.msra.mxu0 0.0
    %1627 = vmatprep.subr.mxu0 0.0
    %1628 = vmatpush1.msra.mxu0 0.0
    %1629 = vmatprep.subr.mxu0 0.0
    %1630 = vmatpush1.msra.mxu0 0.0
    %1631 = vmatprep.subr.mxu0 0.0
    %1632 = vmatpush1.msra.mxu0 0.0
    %1633 = vmatprep.subr.mxu0 0.0
    %1634 = vmatpush1.msra.mxu0 0.0
    %1635 = vmatprep.subr.mxu0 0.0
    %1636 = vmatpush1.msra.mxu0 0.0
    %1637 = vmatprep.subr.mxu0 0.0
    %1638 = vmatpush1.msra.mxu0 0.0
    %1639 = vmatprep.subr.mxu0 0.0
    %1640 = vmatpush1.msra.mxu0 0.0
    %1641 = vmatprep.subr.mxu0 0.0
    %1642 = vmatpush1.msra.mxu0 0.0
    %1643 = vmatprep.mubr.f32.mxu0 0.0
    %1644 = vmatmul.mubr.f32.gmra.mrb[0].mxu0 %v1574
    %v1645 = vpop.f32.mrb[0].mxu0
    %v1646 = vadd.f32 %v1565, %v1645
    %v1647 = vpop.f32.mrb[0].mxu0
    %1648 = vmatprep.mubr.f32.mxu0 0.0
    %1649 = vmatmul.mubr.f32.gmra.mrb[0].mxu0 %v1577
    %v1650 = vpop.f32.mrb[0].mxu0
    %v1651 = vadd.f32 %v1570, %v1650
    %v1652 = vpop.f32.mrb[0].mxu0
    %1653 = vdwg.mxu0
    %s1654 = scalar_lea.vmem [#allocation7], 16
    %v1655 = vld [vmem:[%s1654] sm:$0xff]
    %v1657 = vsel %vm168, %v1485, 0
    %v1660 = vsel %vm168, %v1486, 0
    %1662 = vmatprep.subr.mxu0 0.0
    %1663 = vmatpush1.msra.mxu0 %v1655
    %1664 = vmatprep.subr.mxu0 0.0
    %1665 = vmatpush1.msra.mxu0 0.0
    %1666 = vmatprep.subr.mxu0 0.0
    %1667 = vmatpush1.msra.mxu0 0.0
    %1668 = vmatprep.subr.mxu0 0.0
    %1669 = vmatpush1.msra.mxu0 0.0
    %1670 = vmatprep.subr.mxu0 0.0
    %1671 = vmatpush1.msra.mxu0 0.0
    %1672 = vmatprep.subr.mxu0 0.0
    %1673 = vmatpush1.msra.mxu0 0.0
    %1674 = vmatprep.subr.mxu0 0.0
    %1675 = vmatpush1.msra.mxu0 0.0
    %1676 = vmatprep.subr.mxu0 0.0
    %1677 = vmatpush1.msra.mxu0 0.0
    %1678 = vmatprep.subr.mxu0 0.0
    %1679 = vmatpush1.msra.mxu0 0.0
    %1680 = vmatprep.subr.mxu0 0.0
    %1681 = vmatpush1.msra.mxu0 0.0
    %1682 = vmatprep.subr.mxu0 0.0
    %1683 = vmatpush1.msra.mxu0 0.0
    %1684 = vmatprep.subr.mxu0 0.0
    %1685 = vmatpush1.msra.mxu0 0.0
    %1686 = vmatprep.subr.mxu0 0.0
    %1687 = vmatpush1.msra.mxu0 0.0
    %1688 = vmatprep.subr.mxu0 0.0
    %1689 = vmatpush1.msra.mxu0 0.0
    %1690 = vmatprep.subr.mxu0 0.0
    %1691 = vmatpush1.msra.mxu0 0.0
    %1692 = vmatprep.subr.mxu0 0.0
    %1693 = vmatpush1.msra.mxu0 0.0
    %1694 = vmatprep.subr.mxu0 0.0
    %1695 = vmatpush1.msra.mxu0 0.0
    %1696 = vmatprep.subr.mxu0 0.0
    %1697 = vmatpush1.msra.mxu0 0.0
    %1698 = vmatprep.subr.mxu0 0.0
    %1699 = vmatpush1.msra.mxu0 0.0
    %1700 = vmatprep.subr.mxu0 0.0
    %1701 = vmatpush1.msra.mxu0 0.0
    %1702 = vmatprep.subr.mxu0 0.0
    %1703 = vmatpush1.msra.mxu0 0.0
    %1704 = vmatprep.subr.mxu0 0.0
    %1705 = vmatpush1.msra.mxu0 0.0
    %1706 = vmatprep.subr.mxu0 0.0
    %1707 = vmatpush1.msra.mxu0 0.0
    %1708 = vmatprep.subr.mxu0 0.0
    %1709 = vmatpush1.msra.mxu0 0.0
    %1710 = vmatprep.subr.mxu0 0.0
    %1711 = vmatpush1.msra.mxu0 0.0
    %1712 = vmatprep.subr.mxu0 0.0
    %1713 = vmatpush1.msra.mxu0 0.0
    %1714 = vmatprep.subr.mxu0 0.0
    %1715 = vmatpush1.msra.mxu0 0.0
    %1716 = vmatprep.subr.mxu0 0.0
    %1717 = vmatpush1.msra.mxu0 0.0
    %1718 = vmatprep.subr.mxu0 0.0
    %1719 = vmatpush1.msra.mxu0 0.0
    %1720 = vmatprep.subr.mxu0 0.0
    %1721 = vmatpush1.msra.mxu0 0.0
    %1722 = vmatprep.subr.mxu0 0.0
    %1723 = vmatpush1.msra.mxu0 0.0
    %1724 = vmatprep.subr.mxu0 0.0
    %1725 = vmatpush1.msra.mxu0 0.0
    %1726 = vmatprep.mubr.f32.mxu0 0.0
    %1727 = vmatmul.mubr.f32.gmra.mrb[0].mxu0 %v1657
    %v1728 = vpop.f32.mrb[0].mxu0
    %v1729 = vadd.f32 0.0, %v1728
    %v1730 = vpop.f32.mrb[0].mxu0
    %1731 = vmatprep.mubr.f32.mxu0 0.0
    %1732 = vmatmul.mubr.f32.gmra.mrb[0].mxu0 %v1660
    %v1733 = vpop.f32.mrb[0].mxu0
    %v1734 = vadd.f32 0.0, %v1733
    %v1735 = vpop.f32.mrb[0].mxu0
    %1736 = vdwg.mxu0
    %v1737 = vadd.f32 %v1646, %v1729
    %v1738 = vadd.f32 %v1651, %v1734
    %s1739 = scalar_lea.vmem [#allocation7], 24
    %v1740 = vld [vmem:[%s1739] sm:$0xff]
    %v1742 = vsel %vm168, %v1487, 0
    %v1745 = vsel %vm168, %v1488, 0
    %1747 = vmatprep.subr.mxu0 0.0
    %1748 = vmatpush1.msra.mxu0 %v1740
    %1749 = vmatprep.subr.mxu0 0.0
    %1750 = vmatpush1.msra.mxu0 0.0
    %1751 = vmatprep.subr.mxu0 0.0
    %1752 = vmatpush1.msra.mxu0 0.0
    %1753 = vmatprep.subr.mxu0 0.0
    %1754 = vmatpush1.msra.mxu0 0.0
    %1755 = vmatprep.subr.mxu0 0.0
    %1756 = vmatpush1.msra.mxu0 0.0
    %1757 = vmatprep.subr.mxu0 0.0
    %1758 = vmatpush1.msra.mxu0 0.0
    %1759 = vmatprep.subr.mxu0 0.0
    %1760 = vmatpush1.msra.mxu0 0.0
    %1761 = vmatprep.subr.mxu0 0.0
    %1762 = vmatpush1.msra.mxu0 0.0
    %1763 = vmatprep.subr.mxu0 0.0
    %1764 = vmatpush1.msra.mxu0 0.0
    %1765 = vmatprep.subr.mxu0 0.0
    %1766 = vmatpush1.msra.mxu0 0.0
    %1767 = vmatprep.subr.mxu0 0.0
    %1768 = vmatpush1.msra.mxu0 0.0
    %1769 = vmatprep.subr.mxu0 0.0
    %1770 = vmatpush1.msra.mxu0 0.0
    %1771 = vmatprep.subr.mxu0 0.0
    %1772 = vmatpush1.msra.mxu0 0.0
    %1773 = vmatprep.subr.mxu0 0.0
    %1774 = vmatpush1.msra.mxu0 0.0
    %1775 = vmatprep.subr.mxu0 0.0
    %1776 = vmatpush1.msra.mxu0 0.0
    %1777 = vmatprep.subr.mxu0 0.0
    %1778 = vmatpush1.msra.mxu0 0.0
    %1779 = vmatprep.subr.mxu0 0.0
    %1780 = vmatpush1.msra.mxu0 0.0
    %1781 = vmatprep.subr.mxu0 0.0
    %1782 = vmatpush1.msra.mxu0 0.0
    %1783 = vmatprep.subr.mxu0 0.0
    %1784 = vmatpush1.msra.mxu0 0.0
    %1785 = vmatprep.subr.mxu0 0.0
    %1786 = vmatpush1.msra.mxu0 0.0
    %1787 = vmatprep.subr.mxu0 0.0
    %1788 = vmatpush1.msra.mxu0 0.0
    %1789 = vmatprep.subr.mxu0 0.0
    %1790 = vmatpush1.msra.mxu0 0.0
    %1791 = vmatprep.subr.mxu0 0.0
    %1792 = vmatpush1.msra.mxu0 0.0
    %1793 = vmatprep.subr.mxu0 0.0
    %1794 = vmatpush1.msra.mxu0 0.0
    %1795 = vmatprep.subr.mxu0 0.0
    %1796 = vmatpush1.msra.mxu0 0.0
    %1797 = vmatprep.subr.mxu0 0.0
    %1798 = vmatpush1.msra.mxu0 0.0
    %1799 = vmatprep.subr.mxu0 0.0
    %1800 = vmatpush1.msra.mxu0 0.0
    %1801 = vmatprep.subr.mxu0 0.0
    %1802 = vmatpush1.msra.mxu0 0.0
    %1803 = vmatprep.subr.mxu0 0.0
    %1804 = vmatpush1.msra.mxu0 0.0
    %1805 = vmatprep.subr.mxu0 0.0
    %1806 = vmatpush1.msra.mxu0 0.0
    %1807 = vmatprep.subr.mxu0 0.0
    %1808 = vmatpush1.msra.mxu0 0.0
    %1809 = vmatprep.subr.mxu0 0.0
    %1810 = vmatpush1.msra.mxu0 0.0
    %1811 = vmatprep.mubr.f32.mxu0 0.0
    %1812 = vmatmul.mubr.f32.gmra.mrb[0].mxu0 %v1742
    %v1813 = vpop.f32.mrb[0].mxu0
    %v1814 = vadd.f32 0.0, %v1813
    %v1815 = vpop.f32.mrb[0].mxu0
    %1816 = vmatprep.mubr.f32.mxu0 0.0
    %1817 = vmatmul.mubr.f32.gmra.mrb[0].mxu0 %v1745
    %v1818 = vpop.f32.mrb[0].mxu0
    %v1819 = vadd.f32 0.0, %v1818
    %v1820 = vpop.f32.mrb[0].mxu0
    %1821 = vdwg.mxu0
    %v1822 = vadd.f32 %v1737, %v1814
    %v1823 = vadd.f32 %v1738, %v1819
    %v1824 = vld [vmem:[%s3] sm:$0x1]
    %v1826 = vlaneseq
    %v1827 = vshrl.u32 %v1826, 7
    %v1828 = vsub.s32 0, %v1827
    %v1829 = vrot.slane %v1824, %v1828
    %v1831 = vadd.f32 %v1822, %v1829
    %v1832 = vadd.f32 %v1823, %v1829
    %1833 = vst.msk [vmem:[#allocation8] sm:$0xff] %vm65, %v1831
    %1834 = vst.msk [vmem:[#allocation8 + $0x8] sm:$0xff] %vm65, %v1832
    // Predicated region
    $region30: #{tpu_custom_call.1} parent=1 // pred_check
      _
    $region31: #{tpu_custom_call.1} parent=1 // pred_check_branch
      %1836 = sbr.rel (0) target = $region33
    $region32: #{tpu_custom_call.1} parent=1 // pred_region
      %s1838 = ssub.s32 256, 256
      %1839 = vsyncadd [#allocation4], %s1838
      %s1840 = sshll.u32 [#allocation8], 4
      %s1841 = int_to_ptr.vmem [resolvable:$true] %s1840
      %1846 = dma.vmem_to_hbm [thread:$0]  %s1841, 256, %s4, [#allocation4], 128, 128, 8
    $region33: #{tpu_custom_call.1} parent=1 // pred_fallthru
      _
    // Predicated region
    $region34: #{tpu_custom_call.1} parent=1 // pred_check
      _
    $region35: #{tpu_custom_call.1} parent=1 // pred_check_branch
      %1848 = sbr.rel (0) target = $region37
    $region36: #{tpu_custom_call.1} parent=1 // pred_region
      %1849 = dma.done [#allocation4], 256
    $region37: #{tpu_custom_call.1} parent=1 // pred_fallthru
      _
    %1850 = vsyncpa [#allocation3], 1
    %1851 = vsyncpa [#allocation6], 1
    %1852 = vsyncpa [#allocation4], 1

</llo_original>
